<compile_context>
chip_gen: v7x
topology: tpu7x:2x2x1
jax: 0.10.0
libtpu: 0.0.40
codegen_flags: <defaults>
</compile_context>

<pallas_src>
import functools

import jax
import jax.numpy as jnp
import numpy as np
from jax.experimental import pallas as pl
from jax.experimental.pallas import tpu as pltpu


LN_EPS = 1e-5                    # torch.nn.LayerNorm default


def _round_up(n, m):
    return ((n + m - 1) // m) * m


def _vmem_capacity_bytes():
    try:
        return int(pltpu.get_tpu_info().vmem_capacity_bytes)
    except Exception:
        return 128 << 20         # assume a 128-MiB part if the query fails


def encoder_kernel(x_ref, q_ref,
                   w_in_ref, b_in_ref,
                   w_res_ref, b_res_ref, gamma_ref, beta_ref,
                   w_out_ref, b_out_ref,
                   o_ref,
                   *, n_res_layers, norm, d_true):
    f32 = jnp.float32
    x = x_ref[...]
    q = q_ref[...].astype(f32)           # (tile_m, D) or (1, D); broadcasts below

    # weight_in: Linear(in_dim -> D). Weights pre-transposed to (in, out) on
    # the host, so no in-kernel XLU transpose.
    w_in = w_in_ref[...]
    h = jnp.dot(x.astype(w_in.dtype), w_in,
                preferred_element_type=f32) + b_in_ref[...].astype(f32)

    w_res = w_res_ref[...]
    # Keep bias/gamma/beta at (1, D): the add/mul broadcasts along sublanes,
    # no full-tile materialization living across the residual loop.
    b_res = b_res_ref[...].astype(f32)
    if norm:
        gamma = gamma_ref[...].astype(f32)
        beta = beta_ref[...].astype(f32)
    inv_d = jnp.float32(1.0 / d_true)

    def layer(h):
        r = jnp.dot(h.astype(w_res.dtype), w_res,
                    preferred_element_type=f32) + b_res
        if norm:
            # Fused single-pass LayerNorm over the TRUE feature width d_true.
            # Padded lanes of r are exactly zero (zero-padded weights/biases),
            # so full-width sums equal true-width sums; gamma/beta are zero in
            # the padded lanes, which re-zeroes them after normalization.
            s1 = jnp.sum(r, axis=-1, keepdims=True)
            s2 = jnp.sum(r * r, axis=-1, keepdims=True)
            mu = s1 * inv_d
            var = jnp.maximum(s2 * inv_d - mu * mu, 0.0)
            r = (r - mu) * jax.lax.rsqrt(var + LN_EPS) * gamma + beta
        r = jnp.maximum(r, 0.0)          # ReLU
        return (h + r) * q               # residual add, then scale by q_embedding

    if n_res_layers <= 4:
        # Small stacks: Python unroll (shared weights, see header note).
        for _ in range(n_res_layers):
            h = layer(h)
    else:
        # Deep stacks: bound vreg live ranges, keep modest unroll for LLO.
        h = jax.lax.fori_loop(0, n_res_layers, lambda _, hh: layer(hh), h,
                              unroll=2)

    w_out = w_out_ref[...]
    out = jnp.dot(h.astype(w_out.dtype), w_out, preferred_element_type=f32)
    o_ref[...] = (out + b_out_ref[...].astype(f32)).astype(o_ref.dtype)


def encoder_forward(x, q_embedding, params, *, n_res_layers, norm,
                    tile_m=256, use_bf16=False, stream_buffers=None):
    """x: (..., in_dim), q_embedding broadcast-compatible with (..., dim_encoder)."""
    in_dim = x.shape[-1]
    d_enc = params["w_in"].shape[0]
    d_out = params["w_out"].shape[0]

    lead_shape = x.shape[:-1]
    n_tok = int(np.prod(lead_shape)) if lead_shape else 1

    # Lane-dense (x128) padding only for the hot d_enc path and the output.
    d_enc_p = _round_up(d_enc, 128)
    d_out_p = _round_up(d_out, 128)

    w_dtype = jnp.bfloat16 if use_bf16 else jnp.float32
    x_dtype = jnp.bfloat16 if use_bf16 else jnp.float32

    def pad2(a, rows, cols):
        a = jnp.asarray(a, jnp.float32)
        return jnp.pad(a, ((0, rows - a.shape[0]), (0, cols - a.shape[1])))

    # Host-side parameter prep: transpose to (in, out), zero-pad, cast.
    # ZERO padding of gamma/beta (never ones) is what keeps padded lanes
    # identically zero through the whole residual stream.
    w_in = pad2(jnp.asarray(params["w_in"]).T, in_dim, d_enc_p).astype(w_dtype)
    w_res = pad2(jnp.asarray(params["w_res"]).T, d_enc_p, d_enc_p).astype(w_dtype)
    w_out = pad2(jnp.asarray(params["w_out"]).T, d_enc_p, d_out_p).astype(w_dtype)
    b_in = pad2(params["b_in"], 1, d_enc_p)
    b_res = pad2(params["b_res"], 1, d_enc_p)
    gamma = pad2(params["gamma"], 1, d_enc_p)
    beta = pad2(params["beta"], 1, d_enc_p)
    b_out = pad2(params["b_out"], 1, d_out_p)

    # q_embedding: constant along tokens?  Then pass it compactly (no per-token
    # HBM stream); otherwise stream it per token tile.
    q_arr = jnp.asarray(q_embedding, jnp.float32)
    q_lead = int(np.prod(q_arr.shape[:-1])) if q_arr.ndim > 1 else 1
    q_invariant = (q_lead == 1)

    # ---- token tiling: VMEM-aware, generation-aware, megacore-friendly ------
    row_align = 16 if use_bf16 else 8      # bf16 sublane packing
    x_item = 2 if use_bf16 else 4
    w_item = 2 if use_bf16 else 4

    capacity = _vmem_capacity_bytes()
    if capacity <= (64 << 20):              # v7x-class TC (64 MiB VMEM)
        budget, limit_cap = 40 << 20, 56 << 20
    else:                                   # v5e / v6e (128 MiB VMEM)
        budget, limit_cap = 96 << 20, 112 << 20

    weight_bytes = ((in_dim * d_enc_p + d_enc_p * d_enc_p + d_enc_p * d_out_p) * w_item
                    + (4 * d_enc_p + d_out_p) * 4)

    def _vmem_est(tm, weight_buf):
        act = 2 * tm * (in_dim * x_item + d_out_p * 4)     # streamed x / out tiles
        if not q_invariant:
            act += 2 * tm * d_enc_p * 4                    # streamed q tiles
        interm = 6 * tm * d_enc_p * 4                      # h / r / f32 temporaries
        return weight_buf * weight_bytes + act + interm

    tile_m = max(row_align, _round_up(min(int(tile_m), max(n_tok, 1)), row_align))
    # Guarantee >=2 grid steps when there is enough work so the "parallel"
    # token axis shards across both TensorCores on v7x (harmless on 1-TC chips).
    if n_tok > row_align:
        half = max(row_align, _round_up((n_tok + 1) // 2, row_align))
        tile_m = min(tile_m, half)
    while tile_m > row_align and _vmem_est(tile_m, 1) > budget:
        tile_m = max(row_align, (tile_m // 2 // row_align) * row_align)

    n_pad = _round_up(max(n_tok, 1), tile_m)
    grid = (n_pad // tile_m,)

    # ---- host activation prep ------------------------------------------------
    x2 = jnp.asarray(x, jnp.float32).reshape(n_tok, in_dim)
    x2 = jnp.pad(x2, ((0, n_pad - n_tok), (0, 0))).astype(x_dtype)  # TRUE last-dim width
    if q_invariant:
        q2 = jnp.pad(q_arr.reshape(1, d_enc), ((0, 0), (0, d_enc_p - d_enc)))
    else:
        q2 = jnp.broadcast_to(q_arr, lead_shape + (d_enc,)).reshape(n_tok, d_enc)
        q2 = jnp.pad(q2, ((0, n_pad - n_tok), (0, d_enc_p - d_enc)))

    kernel = functools.partial(encoder_kernel, n_res_layers=n_res_layers,
                               norm=norm, d_true=float(d_enc))

    flops = n_pad * (2 * in_dim * d_enc_p
                     + n_res_layers * 2 * d_enc_p * d_enc_p
                     + 2 * d_enc_p * d_out_p
                     + n_res_layers * 8 * d_enc_p)
    transcendentals = n_pad * n_res_layers if norm else 0
    bytes_accessed = int(
        x2.size * x_item + q2.size * 4 + n_pad * d_out_p * 4
        + (w_in.size + w_res.size + w_out.size) * w_item
        + (b_in.size + b_res.size + gamma.size + beta.size + b_out.size) * 4)

    def _run(single_buffer_params):
        def invariant_spec(shape):
            imap = lambda i: (0,) * len(shape)
            if single_buffer_params:
                # Grid-invariant index_map -> second pipeline buffer is waste.
                return pl.BlockSpec(shape, imap, pipeline_mode=pl.Buffered(1))
            return pl.BlockSpec(shape, imap)

        def row_spec(cols):
            imap = lambda i: (i, 0)
            if single_buffer_params and stream_buffers is not None:
                return pl.BlockSpec((tile_m, cols), imap,
                                    pipeline_mode=pl.Buffered(int(stream_buffers)))
            return pl.BlockSpec((tile_m, cols), imap)

        q_spec = invariant_spec(q2.shape) if q_invariant else row_spec(d_enc_p)
        weight_buf = 1 if single_buffer_params else 2
        vmem_limit = int(min(limit_cap,
                             max(32 << 20, int(_vmem_est(tile_m, weight_buf) * 1.3))))

        return pl.pallas_call(
            kernel,
            out_shape=jax.ShapeDtypeStruct((n_pad, d_out_p), jnp.float32),
            grid_spec=pltpu.PrefetchScalarGridSpec(
                num_scalar_prefetch=0,
                grid=grid,
                in_specs=[
                    row_spec(in_dim),          # x: true-width last dim (no 8x inflation)
                    q_spec,                    # q: streamed or grid-invariant
                    invariant_spec(w_in.shape),   # (in_dim, d_enc_p)  pre-transposed
                    invariant_spec(b_in.shape),   # (1, d_enc_p)
                    invariant_spec(w_res.shape),  # (d_enc_p, d_enc_p) pre-transposed
                    invariant_spec(b_res.shape),  # (1, d_enc_p)
                    invariant_spec(gamma.shape),  # (1, d_enc_p)
                    invariant_spec(beta.shape),   # (1, d_enc_p)
                    invariant_spec(w_out.shape),  # (d_enc_p, d_out_p) pre-transposed
                    invariant_spec(b_out.shape),  # (1, d_out_p)
                ],
                out_specs=pl.BlockSpec((tile_m, d_out_p), lambda i: (i, 0)),
            ),
            compiler_params=pltpu.CompilerParams(
                dimension_semantics=("parallel",),   # token axis fully independent
                vmem_limit_bytes=vmem_limit,
            ),
            cost_estimate=pl.CostEstimate(flops=int(flops),
                                          transcendentals=int(transcendentals),
                                          bytes_accessed=bytes_accessed),
        )(x2, q2, w_in, b_in, w_res, b_res, gamma, beta, w_out, b_out)

    try:
        out2 = _run(True)
    except Exception:
        # Fallback for jax versions without BlockSpec(pipeline_mode=...) /
        # Buffered(1): default double-buffered specs (correctness identical).
        out2 = _run(False)

    out = out2[:n_tok, :d_out]
    return out.reshape(lead_shape + (d_out,)).astype(x.dtype)


def encoder_reference(x, q_embedding, params, *, n_res_layers, norm):
    """Pure-JAX reference mirroring the PyTorch forward (f32)."""
    xf = x.astype(jnp.float32)
    q = jnp.asarray(q_embedding, jnp.float32)
    h = xf @ params["w_in"].T + params["b_in"]
    for _ in range(n_res_layers):
        r = h @ params["w_res"].T + params["b_res"]
        if norm:
            mu = jnp.mean(r, axis=-1, keepdims=True)
            var = jnp.mean(jnp.square(r - mu), axis=-1, keepdims=True)
            r = (r - mu) / jnp.sqrt(var + LN_EPS) * params["gamma"] + params["beta"]
        r = jnp.maximum(r, 0.0)
        h = h + r
        h = h * q
    return h @ params["w_out"].T + params["b_out"]


def init_params(key, in_dim, dim_encoder, dim_encoder_out):
    """Deterministic synthetic parameters (PyTorch nn.Linear shape conventions)."""
    ks = jax.random.split(key, 6)
    scale_in = 1.0 / np.sqrt(in_dim)
    scale_enc = 1.0 / np.sqrt(dim_encoder)
    return {
        "w_in":  jax.random.uniform(ks[0], (dim_encoder, in_dim), jnp.float32,
                                    -scale_in, scale_in),
        "b_in":  jax.random.uniform(ks[1], (1, dim_encoder), jnp.float32,
                                    -scale_in, scale_in),
        "w_res": jax.random.uniform(ks[2], (dim_encoder, dim_encoder), jnp.float32,
                                    -scale_enc, scale_enc),
        "b_res": jax.random.uniform(ks[3], (1, dim_encoder), jnp.float32,
                                    -scale_enc, scale_enc),
        "gamma": jnp.ones((1, dim_encoder), jnp.float32),   # LayerNorm weight init
        "beta":  jnp.zeros((1, dim_encoder), jnp.float32),  # LayerNorm bias init
        "w_out": jax.random.uniform(ks[4], (dim_encoder_out, dim_encoder), jnp.float32,
                                    -scale_enc, scale_enc),
        "b_out": jax.random.uniform(ks[5], (1, dim_encoder_out), jnp.float32,
                                    -scale_enc, scale_enc),
    }


if __name__ == "__main__":
    # Small shapes consistent with the module's forward.
    B, S = 2, 8
    in_dim = 16
    dim_encoder = 32
    dim_encoder_out = 16
    n_res_layers = 2

    key = jax.random.PRNGKey(0)
    k_x, k_q, k_p = jax.random.split(key, 3)

    x = jax.random.normal(k_x, (B, S, in_dim), jnp.float32)
    q_embedding = jax.random.normal(k_q, (B, S, dim_encoder), jnp.float32)
    params = init_params(k_p, in_dim, dim_encoder, dim_encoder_out)

    # f32 MXU path, norm=True (primary correctness check).
    out = encoder_forward(x, q_embedding, params,
                          n_res_layers=n_res_layers, norm=True, tile_m=256)
    out = jax.block_until_ready(out)
    ref = encoder_reference(x, q_embedding, params,
                            n_res_layers=n_res_layers, norm=True)
    np.testing.assert_allclose(np.asarray(out), np.asarray(ref),
                               rtol=5e-5, atol=5e-5)

    # f32 MXU path, norm=False (covers the no-LayerNorm Linear_ResBlock variant).
    out_nn = jax.block_until_ready(encoder_forward(
        x, q_embedding, params, n_res_layers=n_res_layers, norm=False, tile_m=256))
    ref_nn = encoder_reference(x, q_embedding, params,
                               n_res_layers=n_res_layers, norm=False)
    np.testing.assert_allclose(np.asarray(out_nn), np.asarray(ref_nn),
                               rtol=5e-5, atol=5e-5)

    # Token-invariant q (compact grid-invariant operand path).
    q_const = jax.random.normal(jax.random.PRNGKey(7), (dim_encoder,), jnp.float32)
    out_qc = jax.block_until_ready(encoder_forward(
        x, q_const, params, n_res_layers=n_res_layers, norm=True, tile_m=256))
    ref_qc = encoder_reference(x, q_const, params,
                               n_res_layers=n_res_layers, norm=True)
    np.testing.assert_allclose(np.asarray(out_qc), np.asarray(ref_qc),
                               rtol=5e-5, atol=5e-5)

    # bf16 weights + bf16 x streaming with f32 accumulation (v6e/v7x throughput
    # option); loose sanity tolerance because the reference is pure f32.
    out_bf = jax.block_until_ready(encoder_forward(
        x, q_embedding, params, n_res_layers=n_res_layers, norm=True,
        tile_m=256, use_bf16=True))
    np.testing.assert_allclose(np.asarray(out_bf), np.asarray(ref),
                               rtol=2e-1, atol=2e-1)

    print("KERNEL_OK")
</pallas_src>

<mosaic_0001>
module attributes {stable_mosaic.version = 11 : i64} {
  func.func @encoder_kernel(%arg0: i32, %arg1: memref<8x16xf32, #tpu.memory_space<vmem>>, %arg2: memref<8x128xf32, #tpu.memory_space<vmem>>, %arg3: memref<16x128xf32, #tpu.memory_space<vmem>>, %arg4: memref<1x128xf32, #tpu.memory_space<vmem>>, %arg5: memref<128x128xf32, #tpu.memory_space<vmem>>, %arg6: memref<1x128xf32, #tpu.memory_space<vmem>>, %arg7: memref<1x128xf32, #tpu.memory_space<vmem>>, %arg8: memref<1x128xf32, #tpu.memory_space<vmem>>, %arg9: memref<128x128xf32, #tpu.memory_space<vmem>>, %arg10: memref<1x128xf32, #tpu.memory_space<vmem>>, %arg11: memref<8x128xf32, #tpu.memory_space<vmem>>) attributes {dimension_semantics = [#tpu.dimension_semantics<parallel>], iteration_bounds = array<i64: 2>, scalar_prefetch = 0 : i64, scratch_operands = 0 : i64, tpu.core_type = #tpu.core_type<tc>, window_params = [{transform_indices = @transform_0, window_bounds = array<i64: 8, 16>}, {transform_indices = @transform_1, window_bounds = array<i64: 8, 128>}, {pipeline_mode = #tpu.pipeline_mode<synchronous>, transform_indices = @transform_2, window_bounds = array<i64: 16, 128>}, {pipeline_mode = #tpu.pipeline_mode<synchronous>, transform_indices = @transform_3, window_bounds = array<i64: 1, 128>}, {pipeline_mode = #tpu.pipeline_mode<synchronous>, transform_indices = @transform_4, window_bounds = array<i64: 128, 128>}, {pipeline_mode = #tpu.pipeline_mode<synchronous>, transform_indices = @transform_5, window_bounds = array<i64: 1, 128>}, {pipeline_mode = #tpu.pipeline_mode<synchronous>, transform_indices = @transform_6, window_bounds = array<i64: 1, 128>}, {pipeline_mode = #tpu.pipeline_mode<synchronous>, transform_indices = @transform_7, window_bounds = array<i64: 1, 128>}, {pipeline_mode = #tpu.pipeline_mode<synchronous>, transform_indices = @transform_8, window_bounds = array<i64: 128, 128>}, {pipeline_mode = #tpu.pipeline_mode<synchronous>, transform_indices = @transform_9, window_bounds = array<i64: 1, 128>}, {transform_indices = @transform_10, window_bounds = array<i64: 8, 128>}]} {
    %c0 = arith.constant 0 : index
    %c0_0 = arith.constant 0 : index
    %0 = vector.load %arg1[%c0, %c0_0] : memref<8x16xf32, #tpu.memory_space<vmem>>, vector<8x16xf32>
    %c0_1 = arith.constant 0 : index
    %c0_2 = arith.constant 0 : index
    %1 = vector.load %arg2[%c0_1, %c0_2] : memref<8x128xf32, #tpu.memory_space<vmem>>, vector<8x128xf32>
    %c0_3 = arith.constant 0 : index
    %c0_4 = arith.constant 0 : index
    %2 = vector.load %arg3[%c0_3, %c0_4] : memref<16x128xf32, #tpu.memory_space<vmem>>, vector<16x128xf32>
    %cst = arith.constant dense<0.000000e+00> : vector<8x128xf32>
    %3 = tpu.matmul %0, %2, %cst {dimension_numbers = #tpu.dot_dimension_numbers<[1], [0], [0], [1], [0, 0, 1, 1], [], []>} : vector<8x16xf32>, vector<16x128xf32>, vector<8x128xf32> -> vector<8x128xf32>
    %c0_5 = arith.constant 0 : index
    %c0_6 = arith.constant 0 : index
    %4 = vector.load %arg4[%c0_5, %c0_6] : memref<1x128xf32, #tpu.memory_space<vmem>>, vector<1x128xf32>
    %5 = vector.broadcast %4 : vector<1x128xf32> to vector<8x128xf32>
    %6 = arith.addf %3, %5 : vector<8x128xf32>
    %c0_7 = arith.constant 0 : index
    %c0_8 = arith.constant 0 : index
    %7 = vector.load %arg5[%c0_7, %c0_8] : memref<128x128xf32, #tpu.memory_space<vmem>>, vector<128x128xf32>
    %c0_9 = arith.constant 0 : index
    %c0_10 = arith.constant 0 : index
    %8 = vector.load %arg6[%c0_9, %c0_10] : memref<1x128xf32, #tpu.memory_space<vmem>>, vector<1x128xf32>
    %c0_11 = arith.constant 0 : index
    %c0_12 = arith.constant 0 : index
    %9 = vector.load %arg7[%c0_11, %c0_12] : memref<1x128xf32, #tpu.memory_space<vmem>>, vector<1x128xf32>
    %c0_13 = arith.constant 0 : index
    %c0_14 = arith.constant 0 : index
    %10 = vector.load %arg8[%c0_13, %c0_14] : memref<1x128xf32, #tpu.memory_space<vmem>>, vector<1x128xf32>
    %cst_15 = arith.constant dense<0.000000e+00> : vector<8x128xf32>
    %11 = tpu.matmul %6, %7, %cst_15 {dimension_numbers = #tpu.dot_dimension_numbers<[1], [0], [0], [1], [0, 0, 1, 1], [], []>} : vector<8x128xf32>, vector<128x128xf32>, vector<8x128xf32> -> vector<8x128xf32>
    %12 = vector.broadcast %8 : vector<1x128xf32> to vector<8x128xf32>
    %13 = arith.addf %11, %12 : vector<8x128xf32>
    %cst_16 = arith.constant dense<0.000000e+00> : vector<8xf32>
    %14 = vector.multi_reduction <add>, %13, %cst_16 [1] : vector<8x128xf32> to vector<8xf32>
    %15 = vector.shape_cast %14 : vector<8xf32> to vector<8x1xf32>
    %16 = arith.mulf %13, %13 : vector<8x128xf32>
    %cst_17 = arith.constant dense<0.000000e+00> : vector<8xf32>
    %17 = vector.multi_reduction <add>, %16, %cst_17 [1] : vector<8x128xf32> to vector<8xf32>
    %18 = vector.shape_cast %17 : vector<8xf32> to vector<8x1xf32>
    %cst_18 = arith.constant 3.125000e-02 : f32
    %19 = vector.broadcast %cst_18 : f32 to vector<8x1xf32>
    %20 = arith.mulf %15, %19 : vector<8x1xf32>
    %cst_19 = arith.constant 3.125000e-02 : f32
    %21 = vector.broadcast %cst_19 : f32 to vector<8x1xf32>
    %22 = arith.mulf %18, %21 : vector<8x1xf32>
    %23 = arith.mulf %20, %20 : vector<8x1xf32>
    %24 = arith.subf %22, %23 : vector<8x1xf32>
    %cst_20 = arith.constant 0.000000e+00 : f32
    %25 = vector.broadcast %cst_20 : f32 to vector<8x1xf32>
    %26 = arith.maximumf %24, %25 : vector<8x1xf32>
    %27 = vector.broadcast %20 : vector<8x1xf32> to vector<8x128xf32>
    %28 = arith.subf %13, %27 : vector<8x128xf32>
    %cst_21 = arith.constant 9.99999974E-6 : f32
    %29 = vector.broadcast %cst_21 : f32 to vector<8x1xf32>
    %30 = arith.addf %26, %29 : vector<8x1xf32>
    %31 = math.rsqrt %30 : vector<8x1xf32>
    %32 = vector.broadcast %31 : vector<8x1xf32> to vector<8x128xf32>
    %33 = arith.mulf %28, %32 : vector<8x128xf32>
    %34 = vector.broadcast %9 : vector<1x128xf32> to vector<8x128xf32>
    %35 = arith.mulf %33, %34 : vector<8x128xf32>
    %36 = vector.broadcast %10 : vector<1x128xf32> to vector<8x128xf32>
    %37 = arith.addf %35, %36 : vector<8x128xf32>
    %cst_22 = arith.constant 0.000000e+00 : f32
    %38 = vector.broadcast %cst_22 : f32 to vector<8x128xf32>
    %39 = arith.maximumf %37, %38 : vector<8x128xf32>
    %40 = arith.addf %6, %39 : vector<8x128xf32>
    %41 = arith.mulf %40, %1 : vector<8x128xf32>
    %cst_23 = arith.constant dense<0.000000e+00> : vector<8x128xf32>
    %42 = tpu.matmul %41, %7, %cst_23 {dimension_numbers = #tpu.dot_dimension_numbers<[1], [0], [0], [1], [0, 0, 1, 1], [], []>} : vector<8x128xf32>, vector<128x128xf32>, vector<8x128xf32> -> vector<8x128xf32>
    %43 = vector.broadcast %8 : vector<1x128xf32> to vector<8x128xf32>
    %44 = arith.addf %42, %43 : vector<8x128xf32>
    %cst_24 = arith.constant dense<0.000000e+00> : vector<8xf32>
    %45 = vector.multi_reduction <add>, %44, %cst_24 [1] : vector<8x128xf32> to vector<8xf32>
    %46 = vector.shape_cast %45 : vector<8xf32> to vector<8x1xf32>
    %47 = arith.mulf %44, %44 : vector<8x128xf32>
    %cst_25 = arith.constant dense<0.000000e+00> : vector<8xf32>
    %48 = vector.multi_reduction <add>, %47, %cst_25 [1] : vector<8x128xf32> to vector<8xf32>
    %49 = vector.shape_cast %48 : vector<8xf32> to vector<8x1xf32>
    %cst_26 = arith.constant 3.125000e-02 : f32
    %50 = vector.broadcast %cst_26 : f32 to vector<8x1xf32>
    %51 = arith.mulf %46, %50 : vector<8x1xf32>
    %cst_27 = arith.constant 3.125000e-02 : f32
    %52 = vector.broadcast %cst_27 : f32 to vector<8x1xf32>
    %53 = arith.mulf %49, %52 : vector<8x1xf32>
    %54 = arith.mulf %51, %51 : vector<8x1xf32>
    %55 = arith.subf %53, %54 : vector<8x1xf32>
    %cst_28 = arith.constant 0.000000e+00 : f32
    %56 = vector.broadcast %cst_28 : f32 to vector<8x1xf32>
    %57 = arith.maximumf %55, %56 : vector<8x1xf32>
    %58 = vector.broadcast %51 : vector<8x1xf32> to vector<8x128xf32>
    %59 = arith.subf %44, %58 : vector<8x128xf32>
    %cst_29 = arith.constant 9.99999974E-6 : f32
    %60 = vector.broadcast %cst_29 : f32 to vector<8x1xf32>
    %61 = arith.addf %57, %60 : vector<8x1xf32>
    %62 = math.rsqrt %61 : vector<8x1xf32>
    %63 = vector.broadcast %62 : vector<8x1xf32> to vector<8x128xf32>
    %64 = arith.mulf %59, %63 : vector<8x128xf32>
    %65 = vector.broadcast %9 : vector<1x128xf32> to vector<8x128xf32>
    %66 = arith.mulf %64, %65 : vector<8x128xf32>
    %67 = vector.broadcast %10 : vector<1x128xf32> to vector<8x128xf32>
    %68 = arith.addf %66, %67 : vector<8x128xf32>
    %cst_30 = arith.constant 0.000000e+00 : f32
    %69 = vector.broadcast %cst_30 : f32 to vector<8x128xf32>
    %70 = arith.maximumf %68, %69 : vector<8x128xf32>
    %71 = arith.addf %41, %70 : vector<8x128xf32>
    %72 = arith.mulf %71, %1 : vector<8x128xf32>
    %c0_31 = arith.constant 0 : index
    %c0_32 = arith.constant 0 : index
    %73 = vector.load %arg9[%c0_31, %c0_32] : memref<128x128xf32, #tpu.memory_space<vmem>>, vector<128x128xf32>
    %cst_33 = arith.constant dense<0.000000e+00> : vector<8x128xf32>
    %74 = tpu.matmul %72, %73, %cst_33 {dimension_numbers = #tpu.dot_dimension_numbers<[1], [0], [0], [1], [0, 0, 1, 1], [], []>} : vector<8x128xf32>, vector<128x128xf32>, vector<8x128xf32> -> vector<8x128xf32>
    %c0_34 = arith.constant 0 : index
    %c0_35 = arith.constant 0 : index
    %75 = vector.load %arg10[%c0_34, %c0_35] : memref<1x128xf32, #tpu.memory_space<vmem>>, vector<1x128xf32>
    %76 = vector.broadcast %75 : vector<1x128xf32> to vector<8x128xf32>
    %77 = arith.addf %74, %76 : vector<8x128xf32>
    %c0_36 = arith.constant 0 : index
    %c0_37 = arith.constant 0 : index
    %78 = vector.load %arg11[%c0_36, %c0_37] : memref<8x128xf32, #tpu.memory_space<vmem>>, vector<8x128xf32>
    tpu.vector_store %arg11[%c0_36, %c0_37], %77 {strides = array<i32>} : memref<8x128xf32, #tpu.memory_space<vmem>>, vector<8x128xf32>,
    return
  }
  func.func @transform_0(%arg0: i32) -> (i32, i32) {
    %c0_i32 = arith.constant 0 : i32
    %c0_i32_0 = arith.constant 0 : i32
    return %arg0, %c0_i32 : i32, i32
  }
  func.func @transform_1(%arg0: i32) -> (i32, i32) {
    %c0_i32 = arith.constant 0 : i32
    %c0_i32_0 = arith.constant 0 : i32
    return %arg0, %c0_i32 : i32, i32
  }
  func.func @transform_2(%arg0: i32) -> (i32, i32) {
    %c0_i32 = arith.constant 0 : i32
    %c0_i32_0 = arith.constant 0 : i32
    %c0_i32_1 = arith.constant 0 : i32
    return %c0_i32, %c0_i32_0 : i32, i32
  }
  func.func @transform_3(%arg0: i32) -> (i32, i32) {
    %c0_i32 = arith.constant 0 : i32
    %c0_i32_0 = arith.constant 0 : i32
    %c0_i32_1 = arith.constant 0 : i32
    return %c0_i32, %c0_i32_0 : i32, i32
  }
  func.func @transform_4(%arg0: i32) -> (i32, i32) {
    %c0_i32 = arith.constant 0 : i32
    %c0_i32_0 = arith.constant 0 : i32
    %c0_i32_1 = arith.constant 0 : i32
    return %c0_i32, %c0_i32_0 : i32, i32
  }
  func.func @transform_5(%arg0: i32) -> (i32, i32) {
    %c0_i32 = arith.constant 0 : i32
    %c0_i32_0 = arith.constant 0 : i32
    %c0_i32_1 = arith.constant 0 : i32
    return %c0_i32, %c0_i32_0 : i32, i32
  }
  func.func @transform_6(%arg0: i32) -> (i32, i32) {
    %c0_i32 = arith.constant 0 : i32
    %c0_i32_0 = arith.constant 0 : i32
    %c0_i32_1 = arith.constant 0 : i32
    return %c0_i32, %c0_i32_0 : i32, i32
  }
  func.func @transform_7(%arg0: i32) -> (i32, i32) {
    %c0_i32 = arith.constant 0 : i32
    %c0_i32_0 = arith.constant 0 : i32
    %c0_i32_1 = arith.constant 0 : i32
    return %c0_i32, %c0_i32_0 : i32, i32
  }
  func.func @transform_8(%arg0: i32) -> (i32, i32) {
    %c0_i32 = arith.constant 0 : i32
    %c0_i32_0 = arith.constant 0 : i32
    %c0_i32_1 = arith.constant 0 : i32
    return %c0_i32, %c0_i32_0 : i32, i32
  }
  func.func @transform_9(%arg0: i32) -> (i32, i32) {
    %c0_i32 = arith.constant 0 : i32
    %c0_i32_0 = arith.constant 0 : i32
    %c0_i32_1 = arith.constant 0 : i32
    return %c0_i32, %c0_i32_0 : i32, i32
  }
  func.func @transform_10(%arg0: i32) -> (i32, i32) {
    %c0_i32 = arith.constant 0 : i32
    %c0_i32_0 = arith.constant 0 : i32
    return %arg0, %c0_i32 : i32, i32
  }
}

module attributes {stable_mosaic.version = 11 : i64} {
  func.func @encoder_kernel(%arg0: i32, %arg1: memref<8x16xf32, #tpu.memory_space<vmem>>, %arg2: memref<8x128xf32, #tpu.memory_space<vmem>>, %arg3: memref<16x128xf32, #tpu.memory_space<vmem>>, %arg4: memref<1x128xf32, #tpu.memory_space<vmem>>, %arg5: memref<128x128xf32, #tpu.memory_space<vmem>>, %arg6: memref<1x128xf32, #tpu.memory_space<vmem>>, %arg7: memref<1x128xf32, #tpu.memory_space<vmem>>, %arg8: memref<1x128xf32, #tpu.memory_space<vmem>>, %arg9: memref<128x128xf32, #tpu.memory_space<vmem>>, %arg10: memref<1x128xf32, #tpu.memory_space<vmem>>, %arg11: memref<8x128xf32, #tpu.memory_space<vmem>>) attributes {dimension_semantics = [#tpu.dimension_semantics<parallel>], iteration_bounds = array<i64: 2>, scalar_prefetch = 0 : i64, scratch_operands = 0 : i64, tpu.core_type = #tpu.core_type<tc>, window_params = [{transform_indices = @transform_0, window_bounds = array<i64: 8, 16>}, {transform_indices = @transform_1, window_bounds = array<i64: 8, 128>}, {pipeline_mode = #tpu.pipeline_mode<synchronous>, transform_indices = @transform_2, window_bounds = array<i64: 16, 128>}, {pipeline_mode = #tpu.pipeline_mode<synchronous>, transform_indices = @transform_3, window_bounds = array<i64: 1, 128>}, {pipeline_mode = #tpu.pipeline_mode<synchronous>, transform_indices = @transform_4, window_bounds = array<i64: 128, 128>}, {pipeline_mode = #tpu.pipeline_mode<synchronous>, transform_indices = @transform_5, window_bounds = array<i64: 1, 128>}, {pipeline_mode = #tpu.pipeline_mode<synchronous>, transform_indices = @transform_6, window_bounds = array<i64: 1, 128>}, {pipeline_mode = #tpu.pipeline_mode<synchronous>, transform_indices = @transform_7, window_bounds = array<i64: 1, 128>}, {pipeline_mode = #tpu.pipeline_mode<synchronous>, transform_indices = @transform_8, window_bounds = array<i64: 128, 128>}, {pipeline_mode = #tpu.pipeline_mode<synchronous>, transform_indices = @transform_9, window_bounds = array<i64: 1, 128>}, {transform_indices = @transform_10, window_bounds = array<i64: 8, 128>}]} {
    %c0 = arith.constant 0 : index
    %c0_0 = arith.constant 0 : index
    %0 = vector.load %arg1[%c0, %c0_0] : memref<8x16xf32, #tpu.memory_space<vmem>>, vector<8x16xf32>
    %c0_1 = arith.constant 0 : index
    %c0_2 = arith.constant 0 : index
    %1 = vector.load %arg2[%c0_1, %c0_2] : memref<8x128xf32, #tpu.memory_space<vmem>>, vector<8x128xf32>
    %c0_3 = arith.constant 0 : index
    %c0_4 = arith.constant 0 : index
    %2 = vector.load %arg3[%c0_3, %c0_4] : memref<16x128xf32, #tpu.memory_space<vmem>>, vector<16x128xf32>
    %cst = arith.constant dense<0.000000e+00> : vector<8x128xf32>
    %3 = tpu.matmul %0, %2, %cst {dimension_numbers = #tpu.dot_dimension_numbers<[1], [0], [0], [1], [0, 0, 1, 1], [], []>} : vector<8x16xf32>, vector<16x128xf32>, vector<8x128xf32> -> vector<8x128xf32>
    %c0_5 = arith.constant 0 : index
    %c0_6 = arith.constant 0 : index
    %4 = vector.load %arg4[%c0_5, %c0_6] : memref<1x128xf32, #tpu.memory_space<vmem>>, vector<1x128xf32>
    %5 = vector.broadcast %4 : vector<1x128xf32> to vector<8x128xf32>
    %6 = arith.addf %3, %5 : vector<8x128xf32>
    %c0_7 = arith.constant 0 : index
    %c0_8 = arith.constant 0 : index
    %7 = vector.load %arg5[%c0_7, %c0_8] : memref<128x128xf32, #tpu.memory_space<vmem>>, vector<128x128xf32>
    %c0_9 = arith.constant 0 : index
    %c0_10 = arith.constant 0 : index
    %8 = vector.load %arg6[%c0_9, %c0_10] : memref<1x128xf32, #tpu.memory_space<vmem>>, vector<1x128xf32>
    %c0_11 = arith.constant 0 : index
    %c0_12 = arith.constant 0 : index
    %9 = vector.load %arg7[%c0_11, %c0_12] : memref<1x128xf32, #tpu.memory_space<vmem>>, vector<1x128xf32>
    %c0_13 = arith.constant 0 : index
    %c0_14 = arith.constant 0 : index
    %10 = vector.load %arg8[%c0_13, %c0_14] : memref<1x128xf32, #tpu.memory_space<vmem>>, vector<1x128xf32>
    %cst_15 = arith.constant dense<0.000000e+00> : vector<8x128xf32>
    %11 = tpu.matmul %6, %7, %cst_15 {dimension_numbers = #tpu.dot_dimension_numbers<[1], [0], [0], [1], [0, 0, 1, 1], [], []>} : vector<8x128xf32>, vector<128x128xf32>, vector<8x128xf32> -> vector<8x128xf32>
    %12 = vector.broadcast %8 : vector<1x128xf32> to vector<8x128xf32>
    %13 = arith.addf %11, %12 : vector<8x128xf32>
    %cst_16 = arith.constant dense<0.000000e+00> : vector<8xf32>
    %14 = vector.multi_reduction <add>, %13, %cst_16 [1] : vector<8x128xf32> to vector<8xf32>
    %15 = vector.shape_cast %14 : vector<8xf32> to vector<8x1xf32>
    %16 = arith.mulf %13, %13 : vector<8x128xf32>
    %cst_17 = arith.constant dense<0.000000e+00> : vector<8xf32>
    %17 = vector.multi_reduction <add>, %16, %cst_17 [1] : vector<8x128xf32> to vector<8xf32>
    %18 = vector.shape_cast %17 : vector<8xf32> to vector<8x1xf32>
    %cst_18 = arith.constant 3.125000e-02 : f32
    %19 = vector.broadcast %cst_18 : f32 to vector<8x1xf32>
    %20 = arith.mulf %15, %19 : vector<8x1xf32>
    %cst_19 = arith.constant 3.125000e-02 : f32
    %21 = vector.broadcast %cst_19 : f32 to vector<8x1xf32>
    %22 = arith.mulf %18, %21 : vector<8x1xf32>
    %23 = arith.mulf %20, %20 : vector<8x1xf32>
    %24 = arith.subf %22, %23 : vector<8x1xf32>
    %cst_20 = arith.constant 0.000000e+00 : f32
    %25 = vector.broadcast %cst_20 : f32 to vector<8x1xf32>
    %26 = arith.maximumf %24, %25 : vector<8x1xf32>
    %27 = vector.broadcast %20 : vector<8x1xf32> to vector<8x128xf32>
    %28 = arith.subf %13, %27 : vector<8x128xf32>
    %cst_21 = arith.constant 9.99999974E-6 : f32
    %29 = vector.broadcast %cst_21 : f32 to vector<8x1xf32>
    %30 = arith.addf %26, %29 : vector<8x1xf32>
    %31 = math.rsqrt %30 : vector<8x1xf32>
    %32 = vector.broadcast %31 : vector<8x1xf32> to vector<8x128xf32>
    %33 = arith.mulf %28, %32 : vector<8x128xf32>
    %34 = vector.broadcast %9 : vector<1x128xf32> to vector<8x128xf32>
    %35 = arith.mulf %33, %34 : vector<8x128xf32>
    %36 = vector.broadcast %10 : vector<1x128xf32> to vector<8x128xf32>
    %37 = arith.addf %35, %36 : vector<8x128xf32>
    %cst_22 = arith.constant 0.000000e+00 : f32
    %38 = vector.broadcast %cst_22 : f32 to vector<8x128xf32>
    %39 = arith.maximumf %37, %38 : vector<8x128xf32>
    %40 = arith.addf %6, %39 : vector<8x128xf32>
    %41 = arith.mulf %40, %1 : vector<8x128xf32>
    %cst_23 = arith.constant dense<0.000000e+00> : vector<8x128xf32>
    %42 = tpu.matmul %41, %7, %cst_23 {dimension_numbers = #tpu.dot_dimension_numbers<[1], [0], [0], [1], [0, 0, 1, 1], [], []>} : vector<8x128xf32>, vector<128x128xf32>, vector<8x128xf32> -> vector<8x128xf32>
    %43 = vector.broadcast %8 : vector<1x128xf32> to vector<8x128xf32>
    %44 = arith.addf %42, %43 : vector<8x128xf32>
    %cst_24 = arith.constant dense<0.000000e+00> : vector<8xf32>
    %45 = vector.multi_reduction <add>, %44, %cst_24 [1] : vector<8x128xf32> to vector<8xf32>
    %46 = vector.shape_cast %45 : vector<8xf32> to vector<8x1xf32>
    %47 = arith.mulf %44, %44 : vector<8x128xf32>
    %cst_25 = arith.constant dense<0.000000e+00> : vector<8xf32>
    %48 = vector.multi_reduction <add>, %47, %cst_25 [1] : vector<8x128xf32> to vector<8xf32>
    %49 = vector.shape_cast %48 : vector<8xf32> to vector<8x1xf32>
    %cst_26 = arith.constant 3.125000e-02 : f32
    %50 = vector.broadcast %cst_26 : f32 to vector<8x1xf32>
    %51 = arith.mulf %46, %50 : vector<8x1xf32>
    %cst_27 = arith.constant 3.125000e-02 : f32
    %52 = vector.broadcast %cst_27 : f32 to vector<8x1xf32>
    %53 = arith.mulf %49, %52 : vector<8x1xf32>
    %54 = arith.mulf %51, %51 : vector<8x1xf32>
    %55 = arith.subf %53, %54 : vector<8x1xf32>
    %cst_28 = arith.constant 0.000000e+00 : f32
    %56 = vector.broadcast %cst_28 : f32 to vector<8x1xf32>
    %57 = arith.maximumf %55, %56 : vector<8x1xf32>
    %58 = vector.broadcast %51 : vector<8x1xf32> to vector<8x128xf32>
    %59 = arith.subf %44, %58 : vector<8x128xf32>
    %cst_29 = arith.constant 9.99999974E-6 : f32
    %60 = vector.broadcast %cst_29 : f32 to vector<8x1xf32>
    %61 = arith.addf %57, %60 : vector<8x1xf32>
    %62 = math.rsqrt %61 : vector<8x1xf32>
    %63 = vector.broadcast %62 : vector<8x1xf32> to vector<8x128xf32>
    %64 = arith.mulf %59, %63 : vector<8x128xf32>
    %65 = vector.broadcast %9 : vector<1x128xf32> to vector<8x128xf32>
    %66 = arith.mulf %64, %65 : vector<8x128xf32>
    %67 = vector.broadcast %10 : vector<1x128xf32> to vector<8x128xf32>
    %68 = arith.addf %66, %67 : vector<8x128xf32>
    %cst_30 = arith.constant 0.000000e+00 : f32
    %69 = vector.broadcast %cst_30 : f32 to vector<8x128xf32>
    %70 = arith.maximumf %68, %69 : vector<8x128xf32>
    %71 = arith.addf %41, %70 : vector<8x128xf32>
    %72 = arith.mulf %71, %1 : vector<8x128xf32>
    %c0_31 = arith.constant 0 : index
    %c0_32 = arith.constant 0 : index
    %73 = vector.load %arg9[%c0_31, %c0_32] : memref<128x128xf32, #tpu.memory_space<vmem>>, vector<128x128xf32>
    %cst_33 = arith.constant dense<0.000000e+00> : vector<8x128xf32>
    %74 = tpu.matmul %72, %73, %cst_33 {dimension_numbers = #tpu.dot_dimension_numbers<[1], [0], [0], [1], [0, 0, 1, 1], [], []>} : vector<8x128xf32>, vector<128x128xf32>, vector<8x128xf32> -> vector<8x128xf32>
    %c0_34 = arith.constant 0 : index
    %c0_35 = arith.constant 0 : index
    %75 = vector.load %arg10[%c0_34, %c0_35] : memref<1x128xf32, #tpu.memory_space<vmem>>, vector<1x128xf32>
    %76 = vector.broadcast %75 : vector<1x128xf32> to vector<8x128xf32>
    %77 = arith.addf %74, %76 : vector<8x128xf32>
    %c0_36 = arith.constant 0 : index
    %c0_37 = arith.constant 0 : index
    %78 = vector.load %arg11[%c0_36, %c0_37] : memref<8x128xf32, #tpu.memory_space<vmem>>, vector<8x128xf32>
    tpu.vector_store %arg11[%c0_36, %c0_37], %77 {strides = array<i32>} : memref<8x128xf32, #tpu.memory_space<vmem>>, vector<8x128xf32>,
    return
  }
  func.func @transform_0(%arg0: i32) -> (i32, i32) {
    %c0_i32 = arith.constant 0 : i32
    %c0_i32_0 = arith.constant 0 : i32
    return %arg0, %c0_i32 : i32, i32
  }
  func.func @transform_1(%arg0: i32) -> (i32, i32) {
    %c0_i32 = arith.constant 0 : i32
    %c0_i32_0 = arith.constant 0 : i32
    return %arg0, %c0_i32 : i32, i32
  }
  func.func @transform_2(%arg0: i32) -> (i32, i32) {
    %c0_i32 = arith.constant 0 : i32
    %c0_i32_0 = arith.constant 0 : i32
    %c0_i32_1 = arith.constant 0 : i32
    return %c0_i32, %c0_i32_0 : i32, i32
  }
  func.func @transform_3(%arg0: i32) -> (i32, i32) {
    %c0_i32 = arith.constant 0 : i32
    %c0_i32_0 = arith.constant 0 : i32
    %c0_i32_1 = arith.constant 0 : i32
    return %c0_i32, %c0_i32_0 : i32, i32
  }
  func.func @transform_4(%arg0: i32) -> (i32, i32) {
    %c0_i32 = arith.constant 0 : i32
    %c0_i32_0 = arith.constant 0 : i32
    %c0_i32_1 = arith.constant 0 : i32
    return %c0_i32, %c0_i32_0 : i32, i32
  }
  func.func @transform_5(%arg0: i32) -> (i32, i32) {
    %c0_i32 = arith.constant 0 : i32
    %c0_i32_0 = arith.constant 0 : i32
    %c0_i32_1 = arith.constant 0 : i32
    return %c0_i32, %c0_i32_0 : i32, i32
  }
  func.func @transform_6(%arg0: i32) -> (i32, i32) {
    %c0_i32 = arith.constant 0 : i32
    %c0_i32_0 = arith.constant 0 : i32
    %c0_i32_1 = arith.constant 0 : i32
    return %c0_i32, %c0_i32_0 : i32, i32
  }
  func.func @transform_7(%arg0: i32) -> (i32, i32) {
    %c0_i32 = arith.constant 0 : i32
    %c0_i32_0 = arith.constant 0 : i32
    %c0_i32_1 = arith.constant 0 : i32
    return %c0_i32, %c0_i32_0 : i32, i32
  }
  func.func @transform_8(%arg0: i32) -> (i32, i32) {
    %c0_i32 = arith.constant 0 : i32
    %c0_i32_0 = arith.constant 0 : i32
    %c0_i32_1 = arith.constant 0 : i32
    return %c0_i32, %c0_i32_0 : i32, i32
  }
  func.func @transform_9(%arg0: i32) -> (i32, i32) {
    %c0_i32 = arith.constant 0 : i32
    %c0_i32_0 = arith.constant 0 : i32
    %c0_i32_1 = arith.constant 0 : i32
    return %c0_i32, %c0_i32_0 : i32, i32
  }
  func.func @transform_10(%arg0: i32) -> (i32, i32) {
    %c0_i32 = arith.constant 0 : i32
    %c0_i32_0 = arith.constant 0 : i32
    return %arg0, %c0_i32 : i32, i32
  }
}

</mosaic_0001>

<llo_original>
// kernel: tpu_custom_call.1
$region0: #{tpu_custom_call.1}
  #allocation0 [shape = 'u32[]', space=smem, size = 0x4, offset = 0x4, fixed_abs, tag = 'smem constant byte address 0x4 - core index']
  #allocation1 [shape = 'u32[144,128]{1,0:T(1,128)}', space=vmem, size = 0x12000, scoped, tag = 'internal scratch']
  %s0 = inlined_call_operand.hbm [shape: f32[16,16], index: 0, kind: input, shape index: {}]
  %s1 = inlined_call_operand.hbm [shape: f32[16,128], index: 1, kind: input, shape index: {}]
  %s2 = inlined_call_operand.hbm [shape: f32[16,128], index: 2, kind: input, shape index: {}]
  %s3 = inlined_call_operand.vmem [shape: f32[1,128], index: 3, kind: input, shape index: {}]
  %s4 = inlined_call_operand.hbm [shape: f32[128,128], index: 4, kind: input, shape index: {}]
  %s5 = inlined_call_operand.vmem [shape: f32[1,128], index: 5, kind: input, shape index: {}]
  %s6 = inlined_call_operand.vmem [shape: f32[1,128], index: 6, kind: input, shape index: {}]
  %s7 = inlined_call_operand.vmem [shape: f32[1,128], index: 7, kind: input, shape index: {}]
  %s8 = inlined_call_operand.hbm [shape: f32[128,128], index: 8, kind: input, shape index: {}]
  %s9 = inlined_call_operand.vmem [shape: f32[1,128], index: 9, kind: input, shape index: {}]
  %s10 = inlined_call_operand.hbm [shape: f32[16,128], index: 10, kind: output, shape index: {}]
  %s11 = sld [smem:[#allocation0]]
  $region93: #{tpu_custom_call.1} parent=0
    _
  %s13 = ssub.s32 1, %s11
  %s14 = scalar_select 0, %s13, %s11
  $region1: #{tpu_custom_call.1} parent=0
    #allocation2 [shape = 'u8[8192]{0}', space=vmem, size = 0x2000, scoped, tag = 'input window, operand 0']
    #allocation3 [shape = 's32[2]{0}', space=sflag, size = 0x8, scoped, tag = 'scoped memory for tpu_custom_call.1']
    #allocation4 [shape = 's32[2]{0}', space=sflag, size = 0x8, scoped, tag = 'scoped memory for tpu_custom_call.1']
    #allocation5 [shape = 'u8[8192]{0}', space=vmem, size = 0x2000, scoped, tag = 'input window, operand 1']
    #allocation6 [shape = 's32[2]{0}', space=sflag, size = 0x8, scoped, tag = 'scoped memory for tpu_custom_call.1']
    #allocation7 [shape = 'u8[8192]{0}', space=vmem, size = 0x2000, scoped, tag = 'input window, operand 2, single buffered']
    #allocation8 [shape = 'u8[65536]{0}', space=vmem, size = 0x10000, scoped, tag = 'input window, operand 4, single buffered']
    #allocation9 [shape = 's32[1]{0}', space=sflag, size = 0x4, scoped, tag = 'scoped memory for tpu_custom_call.1']
    #allocation10 [shape = 'u8[65536]{0}', space=vmem, size = 0x10000, scoped, tag = 'input window, operand 8, single buffered']
    #allocation11 [shape = 'u8[8192]{0}', space=vmem, size = 0x2000, scoped, tag = 'output window, operand 0']
    %15 = vsyncpa [#allocation3], 0
    %s16 = scalar_lea.sflag [#allocation3], 1
    %17 = vsyncpa %s16, 0
    %18 = vsyncpa [#allocation6], 0
    %s19 = scalar_lea.sflag [#allocation6], 1
    %20 = vsyncpa %s19, 0
    %21 = vsyncpa [#allocation9], 0
    %22 = vsyncpa [#allocation4], 0
    %s23 = scalar_lea.sflag [#allocation4], 1
    %24 = vsyncpa %s23, 0
    loop: start=0, step=1, limit=4
    $region2: #{tpu_custom_call.1} parent=1 // loop_pre_header
      _
    $region3: #{tpu_custom_call.1} parent=1 // loop_header
      %s26 = sphi 0, %s30
      %p27 = scmp.ge.s32.totalorder %s26, 4
      %s36 = sphi 0, %s38
      %s39 = sphi 0, %s36
      %s40 = sphi 0, %s39
      %s56 = sphi 0, %s40
      %s62 = sphi 0, %s64
      %s65 = sphi 0, %s62
      %s66 = sphi 0, %s65
      %s82 = sphi 0, %s66
      %s86 = sphi 0, %s86
      %s88 = sphi 0, %s86
      %s89 = sphi 0, %s88
      %s103 = sphi 0, %s89
      %s107 = sphi 0, %s107
      %s109 = sphi 0, %s107
      %s110 = sphi 0, %s109
      %s124 = sphi 0, %s110
      %s128 = sphi 0, %s128
      %s130 = sphi 0, %s128
      %s131 = sphi 0, %s130
      %s145 = sphi 0, %s131
      %s149 = sphi 0, %s149
      %s151 = sphi 0, %s149
      %s152 = sphi 0, %s151
      %s166 = sphi 0, %s152
      %s170 = sphi 0, %s170
      %s172 = sphi 0, %s170
      %s173 = sphi 0, %s172
      %s187 = sphi 0, %s173
      %s191 = sphi 0, %s191
      %s193 = sphi 0, %s191
      %s194 = sphi 0, %s193
      %s208 = sphi 0, %s194
      %s212 = sphi 0, %s212
      %s214 = sphi 0, %s212
      %s215 = sphi 0, %s214
      %s229 = sphi 0, %s215
      %s233 = sphi 0, %s233
      %s235 = sphi 0, %s233
      %s236 = sphi 0, %s235
      %s250 = sphi 0, %s236
      %s256 = sphi 0, %s258
      %s259 = sphi 0, %s256
      %s260 = sphi 0, %s259
      %s276 = sphi 0, %s260
    $region4: #{tpu_custom_call.1} parent=1 // loop_header_branch
      %29 = sbr.rel (%p27) target = $region8
    $region5: #{tpu_custom_call.1} parent=1 // loop_body
      %s31 = ssub.s32 %s26, 1
      %s32 = ssub.s32 %s26, 2
      %s33 = sadd.s32 %s26, 1
      %s34 = ssub.s32 %s26, %s33
      %p35 = scmp.eq.s32.totalorder %s34, 0
      %s37 = sadd.s32 %s36, 1
      %s38 = scalar_select %p35, %s36, %s37
      %p41 = pneg %p35
      %p42 = scmp.eq.s32.totalorder %s26, 1
      %p43 = por %p41, %p42
      %p44 = scmp.ne.s32.totalorder %s36, %s39
      %p45 = scmp.eq.s32.totalorder %s26, 0
      %p46 = por %p44, %p45
      %p47 = scmp.ne.s32.totalorder %s36, %s39
      %p48 = scmp.eq.s32.totalorder %s31, 1
      %p49 = por %p47, %p48
      %p50 = scmp.ne.s32.totalorder %s39, %s40
      %p51 = scmp.eq.s32.totalorder %s31, 0
      %p52 = por %p50, %p51
      %p53 = scmp.ne.s32.totalorder %s39, %s40
      %p54 = scmp.eq.s32.totalorder %s32, 1
      %p55 = por %p53, %p54
      %p57 = scmp.ne.s32.totalorder %s40, %s56
      %p58 = scmp.eq.s32.totalorder %s32, 0
      %p59 = por %p57, %p58
      %s60 = ssub.s32 %s26, %s33
      %p61 = scmp.eq.s32.totalorder %s60, 0
      %s63 = sadd.s32 %s62, 1
      %s64 = scalar_select %p61, %s62, %s63
      %p67 = pneg %p61
      %p68 = scmp.eq.s32.totalorder %s26, 1
      %p69 = por %p67, %p68
      %p70 = scmp.ne.s32.totalorder %s62, %s65
      %p71 = scmp.eq.s32.totalorder %s26, 0
      %p72 = por %p70, %p71
      %p73 = scmp.ne.s32.totalorder %s62, %s65
      %p74 = scmp.eq.s32.totalorder %s31, 1
      %p75 = por %p73, %p74
      %p76 = scmp.ne.s32.totalorder %s65, %s66
      %p77 = scmp.eq.s32.totalorder %s31, 0
      %p78 = por %p76, %p77
      %p79 = scmp.ne.s32.totalorder %s65, %s66
      %p80 = scmp.eq.s32.totalorder %s32, 1
      %p81 = por %p79, %p80
      %p83 = scmp.ne.s32.totalorder %s66, %s82
      %p84 = scmp.eq.s32.totalorder %s32, 0
      %p85 = por %p83, %p84
      %s87 = sadd.s32 %s86, 1
      %p90 = scmp.eq.s32.totalorder %s26, 1
      %p91 = scmp.ne.s32.totalorder %s86, %s88
      %p92 = scmp.eq.s32.totalorder %s26, 0
      %p93 = por %p91, %p92
      %p94 = scmp.ne.s32.totalorder %s86, %s88
      %p95 = scmp.eq.s32.totalorder %s31, 1
      %p96 = por %p94, %p95
      %p97 = scmp.ne.s32.totalorder %s88, %s89
      %p98 = scmp.eq.s32.totalorder %s31, 0
      %p99 = por %p97, %p98
      %p100 = scmp.ne.s32.totalorder %s88, %s89
      %p101 = scmp.eq.s32.totalorder %s32, 1
      %p102 = por %p100, %p101
      %p104 = scmp.ne.s32.totalorder %s89, %s103
      %p105 = scmp.eq.s32.totalorder %s32, 0
      %p106 = por %p104, %p105
      %s108 = sadd.s32 %s107, 1
      %p111 = scmp.eq.s32.totalorder %s26, 1
      %p112 = scmp.ne.s32.totalorder %s107, %s109
      %p113 = scmp.eq.s32.totalorder %s26, 0
      %p114 = por %p112, %p113
      %p115 = scmp.ne.s32.totalorder %s107, %s109
      %p116 = scmp.eq.s32.totalorder %s31, 1
      %p117 = por %p115, %p116
      %p118 = scmp.ne.s32.totalorder %s109, %s110
      %p119 = scmp.eq.s32.totalorder %s31, 0
      %p120 = por %p118, %p119
      %p121 = scmp.ne.s32.totalorder %s109, %s110
      %p122 = scmp.eq.s32.totalorder %s32, 1
      %p123 = por %p121, %p122
      %p125 = scmp.ne.s32.totalorder %s110, %s124
      %p126 = scmp.eq.s32.totalorder %s32, 0
      %p127 = por %p125, %p126
      %s129 = sadd.s32 %s128, 1
      %p132 = scmp.eq.s32.totalorder %s26, 1
      %p133 = scmp.ne.s32.totalorder %s128, %s130
      %p134 = scmp.eq.s32.totalorder %s26, 0
      %p135 = por %p133, %p134
      %p136 = scmp.ne.s32.totalorder %s128, %s130
      %p137 = scmp.eq.s32.totalorder %s31, 1
      %p138 = por %p136, %p137
      %p139 = scmp.ne.s32.totalorder %s130, %s131
      %p140 = scmp.eq.s32.totalorder %s31, 0
      %p141 = por %p139, %p140
      %p142 = scmp.ne.s32.totalorder %s130, %s131
      %p143 = scmp.eq.s32.totalorder %s32, 1
      %p144 = por %p142, %p143
      %p146 = scmp.ne.s32.totalorder %s131, %s145
      %p147 = scmp.eq.s32.totalorder %s32, 0
      %p148 = por %p146, %p147
      %s150 = sadd.s32 %s149, 1
      %p153 = scmp.eq.s32.totalorder %s26, 1
      %p154 = scmp.ne.s32.totalorder %s149, %s151
      %p155 = scmp.eq.s32.totalorder %s26, 0
      %p156 = por %p154, %p155
      %p157 = scmp.ne.s32.totalorder %s149, %s151
      %p158 = scmp.eq.s32.totalorder %s31, 1
      %p159 = por %p157, %p158
      %p160 = scmp.ne.s32.totalorder %s151, %s152
      %p161 = scmp.eq.s32.totalorder %s31, 0
      %p162 = por %p160, %p161
      %p163 = scmp.ne.s32.totalorder %s151, %s152
      %p164 = scmp.eq.s32.totalorder %s32, 1
      %p165 = por %p163, %p164
      %p167 = scmp.ne.s32.totalorder %s152, %s166
      %p168 = scmp.eq.s32.totalorder %s32, 0
      %p169 = por %p167, %p168
      %s171 = sadd.s32 %s170, 1
      %p174 = scmp.eq.s32.totalorder %s26, 1
      %p175 = scmp.ne.s32.totalorder %s170, %s172
      %p176 = scmp.eq.s32.totalorder %s26, 0
      %p177 = por %p175, %p176
      %p178 = scmp.ne.s32.totalorder %s170, %s172
      %p179 = scmp.eq.s32.totalorder %s31, 1
      %p180 = por %p178, %p179
      %p181 = scmp.ne.s32.totalorder %s172, %s173
      %p182 = scmp.eq.s32.totalorder %s31, 0
      %p183 = por %p181, %p182
      %p184 = scmp.ne.s32.totalorder %s172, %s173
      %p185 = scmp.eq.s32.totalorder %s32, 1
      %p186 = por %p184, %p185
      %p188 = scmp.ne.s32.totalorder %s173, %s187
      %p189 = scmp.eq.s32.totalorder %s32, 0
      %p190 = por %p188, %p189
      %s192 = sadd.s32 %s191, 1
      %p195 = scmp.eq.s32.totalorder %s26, 1
      %p196 = scmp.ne.s32.totalorder %s191, %s193
      %p197 = scmp.eq.s32.totalorder %s26, 0
      %p198 = por %p196, %p197
      %p199 = scmp.ne.s32.totalorder %s191, %s193
      %p200 = scmp.eq.s32.totalorder %s31, 1
      %p201 = por %p199, %p200
      %p202 = scmp.ne.s32.totalorder %s193, %s194
      %p203 = scmp.eq.s32.totalorder %s31, 0
      %p204 = por %p202, %p203
      %p205 = scmp.ne.s32.totalorder %s193, %s194
      %p206 = scmp.eq.s32.totalorder %s32, 1
      %p207 = por %p205, %p206
      %p209 = scmp.ne.s32.totalorder %s194, %s208
      %p210 = scmp.eq.s32.totalorder %s32, 0
      %p211 = por %p209, %p210
      %s213 = sadd.s32 %s212, 1
      %p216 = scmp.eq.s32.totalorder %s26, 1
      %p217 = scmp.ne.s32.totalorder %s212, %s214
      %p218 = scmp.eq.s32.totalorder %s26, 0
      %p219 = por %p217, %p218
      %p220 = scmp.ne.s32.totalorder %s212, %s214
      %p221 = scmp.eq.s32.totalorder %s31, 1
      %p222 = por %p220, %p221
      %p223 = scmp.ne.s32.totalorder %s214, %s215
      %p224 = scmp.eq.s32.totalorder %s31, 0
      %p225 = por %p223, %p224
      %p226 = scmp.ne.s32.totalorder %s214, %s215
      %p227 = scmp.eq.s32.totalorder %s32, 1
      %p228 = por %p226, %p227
      %p230 = scmp.ne.s32.totalorder %s215, %s229
      %p231 = scmp.eq.s32.totalorder %s32, 0
      %p232 = por %p230, %p231
      %s234 = sadd.s32 %s233, 1
      %p237 = scmp.eq.s32.totalorder %s26, 1
      %p238 = scmp.ne.s32.totalorder %s233, %s235
      %p239 = scmp.eq.s32.totalorder %s26, 0
      %p240 = por %p238, %p239
      %p241 = scmp.ne.s32.totalorder %s233, %s235
      %p242 = scmp.eq.s32.totalorder %s31, 1
      %p243 = por %p241, %p242
      %p244 = scmp.ne.s32.totalorder %s235, %s236
      %p245 = scmp.eq.s32.totalorder %s31, 0
      %p246 = por %p244, %p245
      %p247 = scmp.ne.s32.totalorder %s235, %s236
      %p248 = scmp.eq.s32.totalorder %s32, 1
      %p249 = por %p247, %p248
      %p251 = scmp.ne.s32.totalorder %s236, %s250
      %p252 = scmp.eq.s32.totalorder %s32, 0
      %p253 = por %p251, %p252
      %s254 = ssub.s32 %s26, %s33
      %p255 = scmp.eq.s32.totalorder %s254, 0
      %s257 = sadd.s32 %s256, 1
      %s258 = scalar_select %p255, %s256, %s257
      %p261 = pneg %p255
      %p262 = scmp.eq.s32.totalorder %s26, 1
      %p263 = por %p261, %p262
      %p264 = scmp.ne.s32.totalorder %s256, %s259
      %p265 = scmp.eq.s32.totalorder %s26, 0
      %p266 = por %p264, %p265
      %p267 = scmp.ne.s32.totalorder %s256, %s259
      %p268 = scmp.eq.s32.totalorder %s31, 1
      %p269 = por %p267, %p268
      %p270 = scmp.ne.s32.totalorder %s259, %s260
      %p271 = scmp.eq.s32.totalorder %s31, 0
      %p272 = por %p270, %p271
      %p273 = scmp.ne.s32.totalorder %s259, %s260
      %p274 = scmp.eq.s32.totalorder %s32, 1
      %p275 = por %p273, %p274
      %p277 = scmp.ne.s32.totalorder %s260, %s276
      %p278 = scmp.eq.s32.totalorder %s32, 0
      %p279 = por %p277, %p278
      %p280 = scmp.le.s32.totalorder 1, %s26
      %p281 = scmp.lt.s32.totalorder %s26, 3
      %p282 = pnand %p280, %p281
      %p283 = pneg %p282
      // Predicated region
      $region9: #{tpu_custom_call.1} parent=5 // pred_check
        _
      $region10: #{tpu_custom_call.1} parent=5 // pred_check_branch
        %285 = sbr.rel (%p282) target = $region12
      $region11: #{tpu_custom_call.1} parent=5 // pred_region
        %s286 = ssub.s32 %s26, 1
        // Predicated region
        $region13: #{tpu_custom_call.1} parent=11 // pred_check
          %p287 = pneg %p99
        $region14: #{tpu_custom_call.1} parent=11 // pred_check_branch
          %289 = sbr.rel (%p287) target = $region16
        $region15: #{tpu_custom_call.1} parent=11 // pred_region
          %s291 = ssub.s32 256, 256
          %292 = vsyncadd [#allocation6], %s291
          %s293 = sshll.u32 [#allocation7], 4
          %s294 = int_to_ptr.vmem [resolvable:$true] %s293
          %299 = dma.hbm_to_vmem [thread:$0]  %s2, 256, %s294, [#allocation6], 128, 128, 8
        $region16: #{tpu_custom_call.1} parent=11 // pred_fallthru
          _
        // Predicated region
        $region17: #{tpu_custom_call.1} parent=11 // pred_check
          %p300 = pneg %p120
        $region18: #{tpu_custom_call.1} parent=11 // pred_check_branch
          %302 = sbr.rel (%p300) target = $region20
        $region19: #{tpu_custom_call.1} parent=11 // pred_region
          _
        $region20: #{tpu_custom_call.1} parent=11 // pred_fallthru
          _
        // Predicated region
        $region21: #{tpu_custom_call.1} parent=11 // pred_check
          %p303 = pneg %p141
        $region22: #{tpu_custom_call.1} parent=11 // pred_check_branch
          %305 = sbr.rel (%p303) target = $region24
        $region23: #{tpu_custom_call.1} parent=11 // pred_region
          %s307 = ssub.s32 2048, 2048
          %308 = vsyncadd [#allocation9], %s307
          %s309 = sshll.u32 [#allocation8], 4
          %s310 = int_to_ptr.vmem [resolvable:$true] %s309
          %315 = dma.hbm_to_vmem [thread:$0]  %s4, 2048, %s310, [#allocation9], 128, 128, 8
        $region24: #{tpu_custom_call.1} parent=11 // pred_fallthru
          _
        // Predicated region
        $region25: #{tpu_custom_call.1} parent=11 // pred_check
          %p316 = pneg %p162
        $region26: #{tpu_custom_call.1} parent=11 // pred_check_branch
          %318 = sbr.rel (%p316) target = $region28
        $region27: #{tpu_custom_call.1} parent=11 // pred_region
          _
        $region28: #{tpu_custom_call.1} parent=11 // pred_fallthru
          _
        // Predicated region
        $region29: #{tpu_custom_call.1} parent=11 // pred_check
          %p319 = pneg %p183
        $region30: #{tpu_custom_call.1} parent=11 // pred_check_branch
          %321 = sbr.rel (%p319) target = $region32
        $region31: #{tpu_custom_call.1} parent=11 // pred_region
          _
        $region32: #{tpu_custom_call.1} parent=11 // pred_fallthru
          _
        // Predicated region
        $region33: #{tpu_custom_call.1} parent=11 // pred_check
          %p322 = pneg %p204
        $region34: #{tpu_custom_call.1} parent=11 // pred_check_branch
          %324 = sbr.rel (%p322) target = $region36
        $region35: #{tpu_custom_call.1} parent=11 // pred_region
          _
        $region36: #{tpu_custom_call.1} parent=11 // pred_fallthru
          _
        // Predicated region
        $region37: #{tpu_custom_call.1} parent=11 // pred_check
          %p325 = pneg %p225
        $region38: #{tpu_custom_call.1} parent=11 // pred_check_branch
          %327 = sbr.rel (%p325) target = $region40
        $region39: #{tpu_custom_call.1} parent=11 // pred_region
          %s329 = ssub.s32 2048, 2048
          %330 = vsyncadd [#allocation9], %s329
          %s331 = sshll.u32 [#allocation10], 4
          %s332 = int_to_ptr.vmem [resolvable:$true] %s331
          %337 = dma.hbm_to_vmem [thread:$0]  %s8, 2048, %s332, [#allocation9], 128, 128, 8
        $region40: #{tpu_custom_call.1} parent=11 // pred_fallthru
          _
        // Predicated region
        $region41: #{tpu_custom_call.1} parent=11 // pred_check
          %p338 = pneg %p246
        $region42: #{tpu_custom_call.1} parent=11 // pred_check_branch
          %340 = sbr.rel (%p338) target = $region44
        $region43: #{tpu_custom_call.1} parent=11 // pred_region
          _
        $region44: #{tpu_custom_call.1} parent=11 // pred_fallthru
          _
      $region12: #{tpu_custom_call.1} parent=5 // pred_fallthru
        _
      %p341 = scmp.lt.s32.totalorder %s26, 2
      // Predicated region
      $region45: #{tpu_custom_call.1} parent=5 // pred_check
        %p342 = pneg %p341
      $region46: #{tpu_custom_call.1} parent=5 // pred_check_branch
        %344 = sbr.rel (%p342) target = $region48
      $region47: #{tpu_custom_call.1} parent=5 // pred_region
        // Predicated region
        $region49: #{tpu_custom_call.1} parent=47 // pred_check
          %p345 = pneg %p46
        $region50: #{tpu_custom_call.1} parent=47 // pred_check_branch
          %347 = sbr.rel (%p345) target = $region52
        $region51: #{tpu_custom_call.1} parent=47 // pred_region
          %s348 = sand.u32 %s36, 1
          %s349 = scalar_lea.sflag [#allocation3], %s348
          %s350 = sand.u32 %s36, 1
          %s351 = smul.addr %s350, 8
          %s352 = scalar_lea.vmem [#allocation2], %s351
          %s354 = ssub.s32 128, 128
          %355 = vsyncadd %s349, %s354
          %s356 = smul.addr %s26, 128
          %s357 = scalar_lea.hbm %s0, %s356
          %s359 = sshll.u32 %s352, 4
          %s360 = int_to_ptr.vmem [resolvable:$true] %s359
          %362 = dma.hbm_to_vmem [thread:$0]  %s357, 128, %s360, %s349
        $region52: #{tpu_custom_call.1} parent=47 // pred_fallthru
          _
        // Predicated region
        $region53: #{tpu_custom_call.1} parent=47 // pred_check
          %p363 = pneg %p72
        $region54: #{tpu_custom_call.1} parent=47 // pred_check_branch
          %365 = sbr.rel (%p363) target = $region56
        $region55: #{tpu_custom_call.1} parent=47 // pred_region
          %s366 = sand.u32 %s26, 1
          %s367 = scalar_lea.sflag [#allocation6], %s366
          %s368 = sand.u32 %s62, 1
          %s369 = smul.addr %s368, 8
          %s370 = scalar_lea.vmem [#allocation5], %s369
          %s372 = ssub.s32 128, 128
          %373 = vsyncadd %s367, %s372
          %s374 = smul.addr %s26, 128
          %s375 = scalar_lea.hbm %s1, %s374
          %s377 = sshll.u32 %s370, 4
          %s378 = int_to_ptr.vmem [resolvable:$true] %s377
          %380 = dma.hbm_to_vmem [thread:$0]  %s375, 128, %s378, %s367
        $region56: #{tpu_custom_call.1} parent=47 // pred_fallthru
          _
      $region48: #{tpu_custom_call.1} parent=5 // pred_fallthru
        _
      %p381 = scmp.le.s32.totalorder 1, %s26
      %p382 = scmp.lt.s32.totalorder %s26, 3
      %p383 = pnand %p381, %p382
      %p384 = pneg %p383
      // Predicated region
      $region57: #{tpu_custom_call.1} parent=5 // pred_check
        _
      $region58: #{tpu_custom_call.1} parent=5 // pred_check_branch
        %386 = sbr.rel (%p383) target = $region60
      $region59: #{tpu_custom_call.1} parent=5 // pred_region
        %s387 = ssub.s32 %s26, 1
        %s388 = sand.u32 %s39, 1
        %s389 = scalar_lea.sflag [#allocation3], %s388
        %s390 = sand.u32 %s39, 1
        %s391 = smul.addr %s390, 8
        %s392 = scalar_lea.vmem [#allocation2], %s391
        // Predicated region
        $region61: #{tpu_custom_call.1} parent=59 // pred_check
          %p393 = pneg %p52
        $region62: #{tpu_custom_call.1} parent=59 // pred_check_branch
          %395 = sbr.rel (%p393) target = $region64
        $region63: #{tpu_custom_call.1} parent=59 // pred_region
          %396 = dma.done %s389, 128
        $region64: #{tpu_custom_call.1} parent=59 // pred_fallthru
          _
        %s397 = sand.u32 %s31, 1
        %s398 = scalar_lea.sflag [#allocation6], %s397
        %s399 = sand.u32 %s65, 1
        %s400 = smul.addr %s399, 8
        %s401 = scalar_lea.vmem [#allocation5], %s400
        // Predicated region
        $region65: #{tpu_custom_call.1} parent=59 // pred_check
          %p402 = pneg %p78
        $region66: #{tpu_custom_call.1} parent=59 // pred_check_branch
          %404 = sbr.rel (%p402) target = $region68
        $region67: #{tpu_custom_call.1} parent=59 // pred_region
          %405 = dma.done %s398, 128
        $region68: #{tpu_custom_call.1} parent=59 // pred_fallthru
          _
        // Predicated region
        $region69: #{tpu_custom_call.1} parent=59 // pred_check
          %p406 = pneg %p99
        $region70: #{tpu_custom_call.1} parent=59 // pred_check_branch
          %408 = sbr.rel (%p406) target = $region72
        $region71: #{tpu_custom_call.1} parent=59 // pred_region
          %409 = dma.done [#allocation6], 256
        $region72: #{tpu_custom_call.1} parent=59 // pred_fallthru
          _
        // Predicated region
        $region73: #{tpu_custom_call.1} parent=59 // pred_check
          %p410 = pneg %p141
        $region74: #{tpu_custom_call.1} parent=59 // pred_check_branch
          %412 = sbr.rel (%p410) target = $region76
        $region75: #{tpu_custom_call.1} parent=59 // pred_region
          %413 = dma.done [#allocation9], 2048
        $region76: #{tpu_custom_call.1} parent=59 // pred_fallthru
          _
        // Predicated region
        $region77: #{tpu_custom_call.1} parent=59 // pred_check
          %p414 = pneg %p225
        $region78: #{tpu_custom_call.1} parent=59 // pred_check_branch
          %416 = sbr.rel (%p414) target = $region80
        $region79: #{tpu_custom_call.1} parent=59 // pred_region
          %417 = dma.done [#allocation9], 2048
        $region80: #{tpu_custom_call.1} parent=59 // pred_fallthru
          _
        %s418 = sand.u32 %s39, 1
        %s419 = scalar_lea.sflag [#allocation3], %s418
        %s420 = sand.u32 %s39, 1
        %s421 = smul.addr %s420, 8
        %s422 = scalar_lea.vmem [#allocation2], %s421
        %p423 = pneg %p52
        %p424 = pneg %p49
        %s425 = sand.u32 %s31, 1
        %s426 = scalar_lea.sflag [#allocation6], %s425
        %s427 = sand.u32 %s65, 1
        %s428 = smul.addr %s427, 8
        %s429 = scalar_lea.vmem [#allocation5], %s428
        %p430 = pneg %p78
        %p431 = pneg %p75
        %p432 = pneg %p99
        %p433 = pneg %p96
        %p434 = pneg %p120
        %p435 = pneg %p117
        %p436 = pneg %p141
        %p437 = pneg %p138
        %p438 = pneg %p162
        %p439 = pneg %p159
        %p440 = pneg %p183
        %p441 = pneg %p180
        %p442 = pneg %p204
        %p443 = pneg %p201
        %p444 = pneg %p225
        %p445 = pneg %p222
        %p446 = pneg %p246
        %p447 = pneg %p243
        %p448 = pneg %p272
        %p449 = pneg %p269
        %s450 = sand.u32 %s259, 1
        %s451 = scalar_lea.sflag [#allocation4], %s450
        %s452 = sand.u32 %s259, 1
        %s453 = smul.addr %s452, 8
        %s454 = scalar_lea.vmem [#allocation11], %s453
        %v455 = vld [vmem:[%s392] sm:$0xff]
        %v456 = vld [vmem:[%s401] sm:$0xff]
        %v457 = vld [vmem:[#allocation7] sm:$0xff]
        %v458 = vld [vmem:[#allocation7 + $0x8] sm:$0xff]
        %v459 = vld [vmem:[%s3] sm:$0x1]
        %v461 = vlaneseq
        %v462 = vshrl.u32 %v461, 7
        %v463 = vsub.s32 0, %v462
        %v464 = vrot.slane %v459, %v463
        %vm466 = vcmask 130048
        %v468 = vsel %vm466, %v455, 0
        %470 = vmatprep.subr.mxu0 0.0
        %471 = vmatpush1.msra.mxu0 %v457
        %472 = vmatprep.subr.mxu0 0.0
        %473 = vmatpush1.msra.mxu0 %v458
        %474 = vmatprep.subr.mxu0 0.0
        %475 = vmatpush1.msra.mxu0 0.0
        %476 = vmatprep.subr.mxu0 0.0
        %477 = vmatpush1.msra.mxu0 0.0
        %478 = vmatprep.subr.mxu0 0.0
        %479 = vmatpush1.msra.mxu0 0.0
        %480 = vmatprep.subr.mxu0 0.0
        %481 = vmatpush1.msra.mxu0 0.0
        %482 = vmatprep.subr.mxu0 0.0
        %483 = vmatpush1.msra.mxu0 0.0
        %484 = vmatprep.subr.mxu0 0.0
        %485 = vmatpush1.msra.mxu0 0.0
        %486 = vmatprep.subr.mxu0 0.0
        %487 = vmatpush1.msra.mxu0 0.0
        %488 = vmatprep.subr.mxu0 0.0
        %489 = vmatpush1.msra.mxu0 0.0
        %490 = vmatprep.subr.mxu0 0.0
        %491 = vmatpush1.msra.mxu0 0.0
        %492 = vmatprep.subr.mxu0 0.0
        %493 = vmatpush1.msra.mxu0 0.0
        %494 = vmatprep.subr.mxu0 0.0
        %495 = vmatpush1.msra.mxu0 0.0
        %496 = vmatprep.subr.mxu0 0.0
        %497 = vmatpush1.msra.mxu0 0.0
        %498 = vmatprep.subr.mxu0 0.0
        %499 = vmatpush1.msra.mxu0 0.0
        %500 = vmatprep.subr.mxu0 0.0
        %501 = vmatpush1.msra.mxu0 0.0
        %502 = vmatprep.subr.mxu0 0.0
        %503 = vmatpush1.msra.mxu0 0.0
        %504 = vmatprep.subr.mxu0 0.0
        %505 = vmatpush1.msra.mxu0 0.0
        %506 = vmatprep.subr.mxu0 0.0
        %507 = vmatpush1.msra.mxu0 0.0
        %508 = vmatprep.subr.mxu0 0.0
        %509 = vmatpush1.msra.mxu0 0.0
        %510 = vmatprep.subr.mxu0 0.0
        %511 = vmatpush1.msra.mxu0 0.0
        %512 = vmatprep.subr.mxu0 0.0
        %513 = vmatpush1.msra.mxu0 0.0
        %514 = vmatprep.subr.mxu0 0.0
        %515 = vmatpush1.msra.mxu0 0.0
        %516 = vmatprep.subr.mxu0 0.0
        %517 = vmatpush1.msra.mxu0 0.0
        %518 = vmatprep.subr.mxu0 0.0
        %519 = vmatpush1.msra.mxu0 0.0
        %520 = vmatprep.subr.mxu0 0.0
        %521 = vmatpush1.msra.mxu0 0.0
        %522 = vmatprep.subr.mxu0 0.0
        %523 = vmatpush1.msra.mxu0 0.0
        %524 = vmatprep.subr.mxu0 0.0
        %525 = vmatpush1.msra.mxu0 0.0
        %526 = vmatprep.subr.mxu0 0.0
        %527 = vmatpush1.msra.mxu0 0.0
        %528 = vmatprep.subr.mxu0 0.0
        %529 = vmatpush1.msra.mxu0 0.0
        %530 = vmatprep.subr.mxu0 0.0
        %531 = vmatpush1.msra.mxu0 0.0
        %532 = vmatprep.subr.mxu0 0.0
        %533 = vmatpush1.msra.mxu0 0.0
        %534 = vmatprep.mubr.f32.mxu0 0.0
        %535 = vmatmul.mubr.f32.gmra.mrb[0].mxu0 %v468
        %v536 = vpop.f32.mrb[0].mxu0
        %v537 = vadd.f32 %v464, %v536
        %v538 = vpop.f32.mrb[0].mxu0
        %539 = vdwg.mxu0
        %v540 = vld [vmem:[#allocation8] sm:$0xff]
        %v541 = vld [vmem:[#allocation8 + $0x8] sm:$0xff]
        %v542 = vld [vmem:[#allocation8 + $0x10] sm:$0xff]
        %v543 = vld [vmem:[#allocation8 + $0x18] sm:$0xff]
        %v544 = vld [vmem:[#allocation8 + $0x20] sm:$0xff]
        %v545 = vld [vmem:[#allocation8 + $0x28] sm:$0xff]
        %v546 = vld [vmem:[#allocation8 + $0x30] sm:$0xff]
        %v547 = vld [vmem:[#allocation8 + $0x38] sm:$0xff]
        %v548 = vld [vmem:[#allocation8 + $0x40] sm:$0xff]
        %v549 = vld [vmem:[#allocation8 + $0x48] sm:$0xff]
        %v550 = vld [vmem:[#allocation8 + $0x50] sm:$0xff]
        %v551 = vld [vmem:[#allocation8 + $0x58] sm:$0xff]
        %v552 = vld [vmem:[#allocation8 + $0x60] sm:$0xff]
        %v553 = vld [vmem:[#allocation8 + $0x68] sm:$0xff]
        %v554 = vld [vmem:[#allocation8 + $0x70] sm:$0xff]
        %v555 = vld [vmem:[#allocation8 + $0x78] sm:$0xff]
        %v556 = vld [vmem:[%s5] sm:$0x1]
        %v557 = vld [vmem:[%s6] sm:$0x1]
        %v558 = vld [vmem:[%s7] sm:$0x1]
        %v560 = vlaneseq
        %v561 = vshrl.u32 %v560, 7
        %v562 = vsub.s32 0, %v561
        %v563 = vrot.slane %v556, %v562
        %565 = vmatprep.subr.mxu0 0.0
        %566 = vmatpush1.msra.mxu0 %v540
        %567 = vmatprep.subr.mxu0 0.0
        %568 = vmatpush1.msra.mxu0 %v541
        %569 = vmatprep.subr.mxu0 0.0
        %570 = vmatpush1.msra.mxu0 %v542
        %571 = vmatprep.subr.mxu0 0.0
        %572 = vmatpush1.msra.mxu0 %v543
        %573 = vmatprep.subr.mxu0 0.0
        %574 = vmatpush1.msra.mxu0 %v544
        %575 = vmatprep.subr.mxu0 0.0
        %576 = vmatpush1.msra.mxu0 %v545
        %577 = vmatprep.subr.mxu0 0.0
        %578 = vmatpush1.msra.mxu0 %v546
        %579 = vmatprep.subr.mxu0 0.0
        %580 = vmatpush1.msra.mxu0 %v547
        %581 = vmatprep.subr.mxu0 0.0
        %582 = vmatpush1.msra.mxu0 %v548
        %583 = vmatprep.subr.mxu0 0.0
        %584 = vmatpush1.msra.mxu0 %v549
        %585 = vmatprep.subr.mxu0 0.0
        %586 = vmatpush1.msra.mxu0 %v550
        %587 = vmatprep.subr.mxu0 0.0
        %588 = vmatpush1.msra.mxu0 %v551
        %589 = vmatprep.subr.mxu0 0.0
        %590 = vmatpush1.msra.mxu0 %v552
        %591 = vmatprep.subr.mxu0 0.0
        %592 = vmatpush1.msra.mxu0 %v553
        %593 = vmatprep.subr.mxu0 0.0
        %594 = vmatpush1.msra.mxu0 %v554
        %595 = vmatprep.subr.mxu0 0.0
        %596 = vmatpush1.msra.mxu0 %v555
        %597 = vmatprep.subr.mxu0 0.0
        %598 = vmatpush1.msra.mxu0 0.0
        %599 = vmatprep.subr.mxu0 0.0
        %600 = vmatpush1.msra.mxu0 0.0
        %601 = vmatprep.subr.mxu0 0.0
        %602 = vmatpush1.msra.mxu0 0.0
        %603 = vmatprep.subr.mxu0 0.0
        %604 = vmatpush1.msra.mxu0 0.0
        %605 = vmatprep.subr.mxu0 0.0
        %606 = vmatpush1.msra.mxu0 0.0
        %607 = vmatprep.subr.mxu0 0.0
        %608 = vmatpush1.msra.mxu0 0.0
        %609 = vmatprep.subr.mxu0 0.0
        %610 = vmatpush1.msra.mxu0 0.0
        %611 = vmatprep.subr.mxu0 0.0
        %612 = vmatpush1.msra.mxu0 0.0
        %613 = vmatprep.subr.mxu0 0.0
        %614 = vmatpush1.msra.mxu0 0.0
        %615 = vmatprep.subr.mxu0 0.0
        %616 = vmatpush1.msra.mxu0 0.0
        %617 = vmatprep.subr.mxu0 0.0
        %618 = vmatpush1.msra.mxu0 0.0
        %619 = vmatprep.subr.mxu0 0.0
        %620 = vmatpush1.msra.mxu0 0.0
        %621 = vmatprep.subr.mxu0 0.0
        %622 = vmatpush1.msra.mxu0 0.0
        %623 = vmatprep.subr.mxu0 0.0
        %624 = vmatpush1.msra.mxu0 0.0
        %625 = vmatprep.subr.mxu0 0.0
        %626 = vmatpush1.msra.mxu0 0.0
        %627 = vmatprep.subr.mxu0 0.0
        %628 = vmatpush1.msra.mxu0 0.0
        %629 = vmatprep.mubr.f32.mxu0 0.0
        %630 = vmatmul.mubr.f32.gmra.mrb[0].mxu0 %v537
        %v631 = vpop.f32.mrb[0].mxu0
        %v632 = vadd.f32 %v563, %v631
        %v633 = vpop.f32.mrb[0].mxu0
        %634 = vdwg.mxu0
        %635 = vadd.xlane.f32.xlu0 %v632
        %v636 = vpop.xlane.xlu0 %635
        %v637 = vmul.f32 %v632, %v632
        %638 = vadd.xlane.f32.xlu0 %v637
        %v639 = vpop.xlane.xlu0 %638
        %v640 = vmul.f32 %v636, 0.03125
        %v641 = vmul.f32 %v639, 0.03125
        %v642 = vmul.f32 %v640, %v640
        %v643 = vsub.f32 %v641, %v642
        %v644 = vmax.f32 %v643, 0.0
        %v645 = vsub.f32 %v632, %v640
        %v646 = vadd.f32 %v644, 1e-05
        %v647 = vrsqrt.pop %v646
        %v648 = vmul.f32 %v645, %v647
        %v650 = vlaneseq
        %v651 = vshrl.u32 %v650, 7
        %v652 = vsub.s32 0, %v651
        %v653 = vrot.slane %v557, %v652
        %v655 = vmul.f32 %v648, %v653
        %v657 = vlaneseq
        %v658 = vshrl.u32 %v657, 7
        %v659 = vsub.s32 0, %v658
        %v660 = vrot.slane %v558, %v659
        %v662 = vadd.f32 %v655, %v660
        %v663 = vmax.f32 %v662, 0.0
        %v664 = vadd.f32 %v537, %v663
        %v665 = vmul.f32 %v664, %v456
        %666 = vmatprep.subr.mxu0 0.0
        %667 = vmatpush1.msra.mxu0 %v540
        %668 = vmatprep.subr.mxu0 0.0
        %669 = vmatpush1.msra.mxu0 %v541
        %670 = vmatprep.subr.mxu0 0.0
        %671 = vmatpush1.msra.mxu0 %v542
        %672 = vmatprep.subr.mxu0 0.0
        %673 = vmatpush1.msra.mxu0 %v543
        %674 = vmatprep.subr.mxu0 0.0
        %675 = vmatpush1.msra.mxu0 %v544
        %676 = vmatprep.subr.mxu0 0.0
        %677 = vmatpush1.msra.mxu0 %v545
        %678 = vmatprep.subr.mxu0 0.0
        %679 = vmatpush1.msra.mxu0 %v546
        %680 = vmatprep.subr.mxu0 0.0
        %681 = vmatpush1.msra.mxu0 %v547
        %682 = vmatprep.subr.mxu0 0.0
        %683 = vmatpush1.msra.mxu0 %v548
        %684 = vmatprep.subr.mxu0 0.0
        %685 = vmatpush1.msra.mxu0 %v549
        %686 = vmatprep.subr.mxu0 0.0
        %687 = vmatpush1.msra.mxu0 %v550
        %688 = vmatprep.subr.mxu0 0.0
        %689 = vmatpush1.msra.mxu0 %v551
        %690 = vmatprep.subr.mxu0 0.0
        %691 = vmatpush1.msra.mxu0 %v552
        %692 = vmatprep.subr.mxu0 0.0
        %693 = vmatpush1.msra.mxu0 %v553
        %694 = vmatprep.subr.mxu0 0.0
        %695 = vmatpush1.msra.mxu0 %v554
        %696 = vmatprep.subr.mxu0 0.0
        %697 = vmatpush1.msra.mxu0 %v555
        %698 = vmatprep.subr.mxu0 0.0
        %699 = vmatpush1.msra.mxu0 0.0
        %700 = vmatprep.subr.mxu0 0.0
        %701 = vmatpush1.msra.mxu0 0.0
        %702 = vmatprep.subr.mxu0 0.0
        %703 = vmatpush1.msra.mxu0 0.0
        %704 = vmatprep.subr.mxu0 0.0
        %705 = vmatpush1.msra.mxu0 0.0
        %706 = vmatprep.subr.mxu0 0.0
        %707 = vmatpush1.msra.mxu0 0.0
        %708 = vmatprep.subr.mxu0 0.0
        %709 = vmatpush1.msra.mxu0 0.0
        %710 = vmatprep.subr.mxu0 0.0
        %711 = vmatpush1.msra.mxu0 0.0
        %712 = vmatprep.subr.mxu0 0.0
        %713 = vmatpush1.msra.mxu0 0.0
        %714 = vmatprep.subr.mxu0 0.0
        %715 = vmatpush1.msra.mxu0 0.0
        %716 = vmatprep.subr.mxu0 0.0
        %717 = vmatpush1.msra.mxu0 0.0
        %718 = vmatprep.subr.mxu0 0.0
        %719 = vmatpush1.msra.mxu0 0.0
        %720 = vmatprep.subr.mxu0 0.0
        %721 = vmatpush1.msra.mxu0 0.0
        %722 = vmatprep.subr.mxu0 0.0
        %723 = vmatpush1.msra.mxu0 0.0
        %724 = vmatprep.subr.mxu0 0.0
        %725 = vmatpush1.msra.mxu0 0.0
        %726 = vmatprep.subr.mxu0 0.0
        %727 = vmatpush1.msra.mxu0 0.0
        %728 = vmatprep.subr.mxu0 0.0
        %729 = vmatpush1.msra.mxu0 0.0
        %730 = vmatprep.mubr.f32.mxu0 0.0
        %731 = vmatmul.mubr.f32.gmra.mrb[0].mxu0 %v665
        %v732 = vpop.f32.mrb[0].mxu0
        %v733 = vadd.f32 %v563, %v732
        %v734 = vpop.f32.mrb[0].mxu0
        %735 = vdwg.mxu0
        %736 = vadd.xlane.f32.xlu0 %v733
        %v737 = vpop.xlane.xlu0 %736
        %v738 = vmul.f32 %v733, %v733
        %739 = vadd.xlane.f32.xlu0 %v738
        %v740 = vpop.xlane.xlu0 %739
        %v741 = vmul.f32 %v737, 0.03125
        %v742 = vmul.f32 %v740, 0.03125
        %v743 = vmul.f32 %v741, %v741
        %v744 = vsub.f32 %v742, %v743
        %v745 = vmax.f32 %v744, 0.0
        %v746 = vsub.f32 %v733, %v741
        %v747 = vadd.f32 %v745, 1e-05
        %v748 = vrsqrt.pop %v747
        %v749 = vmul.f32 %v746, %v748
        %v750 = vmul.f32 %v749, %v653
        %v751 = vadd.f32 %v750, %v660
        %v752 = vmax.f32 %v751, 0.0
        %v753 = vadd.f32 %v665, %v752
        %v754 = vmul.f32 %v753, %v456
        %v755 = vld [vmem:[#allocation10] sm:$0xff]
        %v756 = vld [vmem:[#allocation10 + $0x8] sm:$0xff]
        %v757 = vld [vmem:[#allocation10 + $0x10] sm:$0xff]
        %v758 = vld [vmem:[#allocation10 + $0x18] sm:$0xff]
        %v759 = vld [vmem:[#allocation10 + $0x20] sm:$0xff]
        %v760 = vld [vmem:[#allocation10 + $0x28] sm:$0xff]
        %v761 = vld [vmem:[#allocation10 + $0x30] sm:$0xff]
        %v762 = vld [vmem:[#allocation10 + $0x38] sm:$0xff]
        %v763 = vld [vmem:[#allocation10 + $0x40] sm:$0xff]
        %v764 = vld [vmem:[#allocation10 + $0x48] sm:$0xff]
        %v765 = vld [vmem:[#allocation10 + $0x50] sm:$0xff]
        %v766 = vld [vmem:[#allocation10 + $0x58] sm:$0xff]
        %v767 = vld [vmem:[#allocation10 + $0x60] sm:$0xff]
        %v768 = vld [vmem:[#allocation10 + $0x68] sm:$0xff]
        %v769 = vld [vmem:[#allocation10 + $0x70] sm:$0xff]
        %v770 = vld [vmem:[#allocation10 + $0x78] sm:$0xff]
        %v771 = vld [vmem:[%s9] sm:$0x1]
        %v773 = vlaneseq
        %v774 = vshrl.u32 %v773, 7
        %v775 = vsub.s32 0, %v774
        %v776 = vrot.slane %v771, %v775
        %778 = vmatprep.subr.mxu0 0.0
        %779 = vmatpush1.msra.mxu0 %v755
        %780 = vmatprep.subr.mxu0 0.0
        %781 = vmatpush1.msra.mxu0 %v756
        %782 = vmatprep.subr.mxu0 0.0
        %783 = vmatpush1.msra.mxu0 %v757
        %784 = vmatprep.subr.mxu0 0.0
        %785 = vmatpush1.msra.mxu0 %v758
        %786 = vmatprep.subr.mxu0 0.0
        %787 = vmatpush1.msra.mxu0 %v759
        %788 = vmatprep.subr.mxu0 0.0
        %789 = vmatpush1.msra.mxu0 %v760
        %790 = vmatprep.subr.mxu0 0.0
        %791 = vmatpush1.msra.mxu0 %v761
        %792 = vmatprep.subr.mxu0 0.0
        %793 = vmatpush1.msra.mxu0 %v762
        %794 = vmatprep.subr.mxu0 0.0
        %795 = vmatpush1.msra.mxu0 %v763
        %796 = vmatprep.subr.mxu0 0.0
        %797 = vmatpush1.msra.mxu0 %v764
        %798 = vmatprep.subr.mxu0 0.0
        %799 = vmatpush1.msra.mxu0 %v765
        %800 = vmatprep.subr.mxu0 0.0
        %801 = vmatpush1.msra.mxu0 %v766
        %802 = vmatprep.subr.mxu0 0.0
        %803 = vmatpush1.msra.mxu0 %v767
        %804 = vmatprep.subr.mxu0 0.0
        %805 = vmatpush1.msra.mxu0 %v768
        %806 = vmatprep.subr.mxu0 0.0
        %807 = vmatpush1.msra.mxu0 %v769
        %808 = vmatprep.subr.mxu0 0.0
        %809 = vmatpush1.msra.mxu0 %v770
        %810 = vmatprep.subr.mxu0 0.0
        %811 = vmatpush1.msra.mxu0 0.0
        %812 = vmatprep.subr.mxu0 0.0
        %813 = vmatpush1.msra.mxu0 0.0
        %814 = vmatprep.subr.mxu0 0.0
        %815 = vmatpush1.msra.mxu0 0.0
        %816 = vmatprep.subr.mxu0 0.0
        %817 = vmatpush1.msra.mxu0 0.0
        %818 = vmatprep.subr.mxu0 0.0
        %819 = vmatpush1.msra.mxu0 0.0
        %820 = vmatprep.subr.mxu0 0.0
        %821 = vmatpush1.msra.mxu0 0.0
        %822 = vmatprep.subr.mxu0 0.0
        %823 = vmatpush1.msra.mxu0 0.0
        %824 = vmatprep.subr.mxu0 0.0
        %825 = vmatpush1.msra.mxu0 0.0
        %826 = vmatprep.subr.mxu0 0.0
        %827 = vmatpush1.msra.mxu0 0.0
        %828 = vmatprep.subr.mxu0 0.0
        %829 = vmatpush1.msra.mxu0 0.0
        %830 = vmatprep.subr.mxu0 0.0
        %831 = vmatpush1.msra.mxu0 0.0
        %832 = vmatprep.subr.mxu0 0.0
        %833 = vmatpush1.msra.mxu0 0.0
        %834 = vmatprep.subr.mxu0 0.0
        %835 = vmatpush1.msra.mxu0 0.0
        %836 = vmatprep.subr.mxu0 0.0
        %837 = vmatpush1.msra.mxu0 0.0
        %838 = vmatprep.subr.mxu0 0.0
        %839 = vmatpush1.msra.mxu0 0.0
        %840 = vmatprep.subr.mxu0 0.0
        %841 = vmatpush1.msra.mxu0 0.0
        %842 = vmatprep.mubr.f32.mxu0 0.0
        %843 = vmatmul.mubr.f32.gmra.mrb[0].mxu0 %v754
        %v844 = vpop.f32.mrb[0].mxu0
        %v845 = vadd.f32 %v776, %v844
        %v846 = vpop.f32.mrb[0].mxu0
        %847 = vdwg.mxu0
        %848 = vst [vmem:[%s454] sm:$0xff] %v845
        %s849 = sand.u32 %s259, 1
        %s850 = scalar_lea.sflag [#allocation4], %s849
        %s851 = sand.u32 %s259, 1
        %s852 = smul.addr %s851, 8
        %s853 = scalar_lea.vmem [#allocation11], %s852
        // Predicated region
        $region81: #{tpu_custom_call.1} parent=59 // pred_check
          %p854 = pneg %p269
        $region82: #{tpu_custom_call.1} parent=59 // pred_check_branch
          %856 = sbr.rel (%p854) target = $region84
        $region83: #{tpu_custom_call.1} parent=59 // pred_region
          %s858 = ssub.s32 128, 128
          %859 = vsyncadd %s850, %s858
          %s860 = smul.addr %s31, 128
          %s861 = scalar_lea.hbm %s10, %s860
          %s863 = sshll.u32 %s853, 4
          %s864 = int_to_ptr.vmem [resolvable:$true] %s863
          %866 = dma.vmem_to_hbm [thread:$0]  %s864, 128, %s861, %s850
        $region84: #{tpu_custom_call.1} parent=59 // pred_fallthru
          _
      $region60: #{tpu_custom_call.1} parent=5 // pred_fallthru
        _
      %p867 = scmp.le.s32.totalorder 2, %s26
      // Predicated region
      $region85: #{tpu_custom_call.1} parent=5 // pred_check
        %p868 = pneg %p867
      $region86: #{tpu_custom_call.1} parent=5 // pred_check_branch
        %870 = sbr.rel (%p868) target = $region88
      $region87: #{tpu_custom_call.1} parent=5 // pred_region
        %s871 = ssub.s32 %s26, 2
        // Predicated region
        $region89: #{tpu_custom_call.1} parent=87 // pred_check
          %p872 = pneg %p275
        $region90: #{tpu_custom_call.1} parent=87 // pred_check_branch
          %874 = sbr.rel (%p872) target = $region92
        $region91: #{tpu_custom_call.1} parent=87 // pred_region
          %s875 = sand.u32 %s260, 1
          %s876 = scalar_lea.sflag [#allocation4], %s875
          %s877 = sand.u32 %s260, 1
          %s878 = smul.addr %s877, 8
          %s879 = scalar_lea.vmem [#allocation11], %s878
          %880 = dma.done %s876, 128
        $region92: #{tpu_custom_call.1} parent=87 // pred_fallthru
          _
      $region88: #{tpu_custom_call.1} parent=5 // pred_fallthru
        _
    $region6: #{tpu_custom_call.1} parent=1 // loop_footer
      %s30 = sadd.s32 1, %s26
    $region7: #{tpu_custom_call.1} parent=1 // loop_footer_branch
      %25 = sbr.rel target = $region3
    $region8: #{tpu_custom_call.1} parent=1 // loop_exit
      _
    %881 = vsyncpa [#allocation3], 1
    %s882 = scalar_lea.sflag [#allocation3], 1
    %883 = vsyncpa %s882, 1
    %884 = vsyncpa [#allocation6], 1
    %s885 = scalar_lea.sflag [#allocation6], 1
    %886 = vsyncpa %s885, 1
    %887 = vsyncpa [#allocation9], 1
    %888 = vsyncpa [#allocation4], 1
    %s889 = scalar_lea.sflag [#allocation4], 1
    %890 = vsyncpa %s889, 1

// kernel: tpu_custom_call.1
$region0: #{tpu_custom_call.1}
  #allocation0 [shape = 'u32[]', space=smem, size = 0x4, offset = 0x4, fixed_abs, tag = 'smem constant byte address 0x4 - core index']
  #allocation1 [shape = 'u32[144,128]{1,0:T(1,128)}', space=vmem, size = 0x12000, scoped, tag = 'internal scratch']
  %s0 = inlined_call_operand.hbm [shape: f32[16,16], index: 0, kind: input, shape index: {}]
  %s1 = inlined_call_operand.hbm [shape: f32[16,128], index: 1, kind: input, shape index: {}]
  %s2 = inlined_call_operand.hbm [shape: f32[16,128], index: 2, kind: input, shape index: {}]
  %s3 = inlined_call_operand.vmem [shape: f32[1,128], index: 3, kind: input, shape index: {}]
  %s4 = inlined_call_operand.hbm [shape: f32[128,128], index: 4, kind: input, shape index: {}]
  %s5 = inlined_call_operand.vmem [shape: f32[1,128], index: 5, kind: input, shape index: {}]
  %s6 = inlined_call_operand.vmem [shape: f32[1,128], index: 6, kind: input, shape index: {}]
  %s7 = inlined_call_operand.vmem [shape: f32[1,128], index: 7, kind: input, shape index: {}]
  %s8 = inlined_call_operand.hbm [shape: f32[128,128], index: 8, kind: input, shape index: {}]
  %s9 = inlined_call_operand.vmem [shape: f32[1,128], index: 9, kind: input, shape index: {}]
  %s10 = inlined_call_operand.hbm [shape: f32[16,128], index: 10, kind: output, shape index: {}]
  %s11 = sld [smem:[#allocation0]]
  $region93: #{tpu_custom_call.1} parent=0
    _
  %s13 = ssub.s32 1, %s11
  %s14 = scalar_select 0, %s13, %s11
  $region1: #{tpu_custom_call.1} parent=0
    #allocation2 [shape = 'u8[8192]{0}', space=vmem, size = 0x2000, scoped, tag = 'input window, operand 0']
    #allocation3 [shape = 's32[2]{0}', space=sflag, size = 0x8, scoped, tag = 'scoped memory for tpu_custom_call.1']
    #allocation4 [shape = 's32[2]{0}', space=sflag, size = 0x8, scoped, tag = 'scoped memory for tpu_custom_call.1']
    #allocation5 [shape = 'u8[8192]{0}', space=vmem, size = 0x2000, scoped, tag = 'input window, operand 1']
    #allocation6 [shape = 's32[2]{0}', space=sflag, size = 0x8, scoped, tag = 'scoped memory for tpu_custom_call.1']
    #allocation7 [shape = 'u8[8192]{0}', space=vmem, size = 0x2000, scoped, tag = 'input window, operand 2, single buffered']
    #allocation8 [shape = 'u8[65536]{0}', space=vmem, size = 0x10000, scoped, tag = 'input window, operand 4, single buffered']
    #allocation9 [shape = 's32[1]{0}', space=sflag, size = 0x4, scoped, tag = 'scoped memory for tpu_custom_call.1']
    #allocation10 [shape = 'u8[65536]{0}', space=vmem, size = 0x10000, scoped, tag = 'input window, operand 8, single buffered']
    #allocation11 [shape = 'u8[8192]{0}', space=vmem, size = 0x2000, scoped, tag = 'output window, operand 0']
    %15 = vsyncpa [#allocation3], 0
    %s16 = scalar_lea.sflag [#allocation3], 1
    %17 = vsyncpa %s16, 0
    %18 = vsyncpa [#allocation6], 0
    %s19 = scalar_lea.sflag [#allocation6], 1
    %20 = vsyncpa %s19, 0
    %21 = vsyncpa [#allocation9], 0
    %22 = vsyncpa [#allocation4], 0
    %s23 = scalar_lea.sflag [#allocation4], 1
    %24 = vsyncpa %s23, 0
    loop: start=0, step=1, limit=4
    $region2: #{tpu_custom_call.1} parent=1 // loop_pre_header
      _
    $region3: #{tpu_custom_call.1} parent=1 // loop_header
      %s26 = sphi 0, %s30
      %p27 = scmp.ge.s32.totalorder %s26, 4
      %s36 = sphi 0, %s38
      %s39 = sphi 0, %s36
      %s40 = sphi 0, %s39
      %s56 = sphi 0, %s40
      %s62 = sphi 0, %s64
      %s65 = sphi 0, %s62
      %s66 = sphi 0, %s65
      %s82 = sphi 0, %s66
      %s86 = sphi 0, %s86
      %s88 = sphi 0, %s86
      %s89 = sphi 0, %s88
      %s103 = sphi 0, %s89
      %s107 = sphi 0, %s107
      %s109 = sphi 0, %s107
      %s110 = sphi 0, %s109
      %s124 = sphi 0, %s110
      %s128 = sphi 0, %s128
      %s130 = sphi 0, %s128
      %s131 = sphi 0, %s130
      %s145 = sphi 0, %s131
      %s149 = sphi 0, %s149
      %s151 = sphi 0, %s149
      %s152 = sphi 0, %s151
      %s166 = sphi 0, %s152
      %s170 = sphi 0, %s170
      %s172 = sphi 0, %s170
      %s173 = sphi 0, %s172
      %s187 = sphi 0, %s173
      %s191 = sphi 0, %s191
      %s193 = sphi 0, %s191
      %s194 = sphi 0, %s193
      %s208 = sphi 0, %s194
      %s212 = sphi 0, %s212
      %s214 = sphi 0, %s212
      %s215 = sphi 0, %s214
      %s229 = sphi 0, %s215
      %s233 = sphi 0, %s233
      %s235 = sphi 0, %s233
      %s236 = sphi 0, %s235
      %s250 = sphi 0, %s236
      %s256 = sphi 0, %s258
      %s259 = sphi 0, %s256
      %s260 = sphi 0, %s259
      %s276 = sphi 0, %s260
    $region4: #{tpu_custom_call.1} parent=1 // loop_header_branch
      %29 = sbr.rel (%p27) target = $region8
    $region5: #{tpu_custom_call.1} parent=1 // loop_body
      %s31 = ssub.s32 %s26, 1
      %s32 = ssub.s32 %s26, 2
      %s33 = sadd.s32 %s26, 1
      %s34 = ssub.s32 %s26, %s33
      %p35 = scmp.eq.s32.totalorder %s34, 0
      %s37 = sadd.s32 %s36, 1
      %s38 = scalar_select %p35, %s36, %s37
      %p41 = pneg %p35
      %p42 = scmp.eq.s32.totalorder %s26, 1
      %p43 = por %p41, %p42
      %p44 = scmp.ne.s32.totalorder %s36, %s39
      %p45 = scmp.eq.s32.totalorder %s26, 0
      %p46 = por %p44, %p45
      %p47 = scmp.ne.s32.totalorder %s36, %s39
      %p48 = scmp.eq.s32.totalorder %s31, 1
      %p49 = por %p47, %p48
      %p50 = scmp.ne.s32.totalorder %s39, %s40
      %p51 = scmp.eq.s32.totalorder %s31, 0
      %p52 = por %p50, %p51
      %p53 = scmp.ne.s32.totalorder %s39, %s40
      %p54 = scmp.eq.s32.totalorder %s32, 1
      %p55 = por %p53, %p54
      %p57 = scmp.ne.s32.totalorder %s40, %s56
      %p58 = scmp.eq.s32.totalorder %s32, 0
      %p59 = por %p57, %p58
      %s60 = ssub.s32 %s26, %s33
      %p61 = scmp.eq.s32.totalorder %s60, 0
      %s63 = sadd.s32 %s62, 1
      %s64 = scalar_select %p61, %s62, %s63
      %p67 = pneg %p61
      %p68 = scmp.eq.s32.totalorder %s26, 1
      %p69 = por %p67, %p68
      %p70 = scmp.ne.s32.totalorder %s62, %s65
      %p71 = scmp.eq.s32.totalorder %s26, 0
      %p72 = por %p70, %p71
      %p73 = scmp.ne.s32.totalorder %s62, %s65
      %p74 = scmp.eq.s32.totalorder %s31, 1
      %p75 = por %p73, %p74
      %p76 = scmp.ne.s32.totalorder %s65, %s66
      %p77 = scmp.eq.s32.totalorder %s31, 0
      %p78 = por %p76, %p77
      %p79 = scmp.ne.s32.totalorder %s65, %s66
      %p80 = scmp.eq.s32.totalorder %s32, 1
      %p81 = por %p79, %p80
      %p83 = scmp.ne.s32.totalorder %s66, %s82
      %p84 = scmp.eq.s32.totalorder %s32, 0
      %p85 = por %p83, %p84
      %s87 = sadd.s32 %s86, 1
      %p90 = scmp.eq.s32.totalorder %s26, 1
      %p91 = scmp.ne.s32.totalorder %s86, %s88
      %p92 = scmp.eq.s32.totalorder %s26, 0
      %p93 = por %p91, %p92
      %p94 = scmp.ne.s32.totalorder %s86, %s88
      %p95 = scmp.eq.s32.totalorder %s31, 1
      %p96 = por %p94, %p95
      %p97 = scmp.ne.s32.totalorder %s88, %s89
      %p98 = scmp.eq.s32.totalorder %s31, 0
      %p99 = por %p97, %p98
      %p100 = scmp.ne.s32.totalorder %s88, %s89
      %p101 = scmp.eq.s32.totalorder %s32, 1
      %p102 = por %p100, %p101
      %p104 = scmp.ne.s32.totalorder %s89, %s103
      %p105 = scmp.eq.s32.totalorder %s32, 0
      %p106 = por %p104, %p105
      %s108 = sadd.s32 %s107, 1
      %p111 = scmp.eq.s32.totalorder %s26, 1
      %p112 = scmp.ne.s32.totalorder %s107, %s109
      %p113 = scmp.eq.s32.totalorder %s26, 0
      %p114 = por %p112, %p113
      %p115 = scmp.ne.s32.totalorder %s107, %s109
      %p116 = scmp.eq.s32.totalorder %s31, 1
      %p117 = por %p115, %p116
      %p118 = scmp.ne.s32.totalorder %s109, %s110
      %p119 = scmp.eq.s32.totalorder %s31, 0
      %p120 = por %p118, %p119
      %p121 = scmp.ne.s32.totalorder %s109, %s110
      %p122 = scmp.eq.s32.totalorder %s32, 1
      %p123 = por %p121, %p122
      %p125 = scmp.ne.s32.totalorder %s110, %s124
      %p126 = scmp.eq.s32.totalorder %s32, 0
      %p127 = por %p125, %p126
      %s129 = sadd.s32 %s128, 1
      %p132 = scmp.eq.s32.totalorder %s26, 1
      %p133 = scmp.ne.s32.totalorder %s128, %s130
      %p134 = scmp.eq.s32.totalorder %s26, 0
      %p135 = por %p133, %p134
      %p136 = scmp.ne.s32.totalorder %s128, %s130
      %p137 = scmp.eq.s32.totalorder %s31, 1
      %p138 = por %p136, %p137
      %p139 = scmp.ne.s32.totalorder %s130, %s131
      %p140 = scmp.eq.s32.totalorder %s31, 0
      %p141 = por %p139, %p140
      %p142 = scmp.ne.s32.totalorder %s130, %s131
      %p143 = scmp.eq.s32.totalorder %s32, 1
      %p144 = por %p142, %p143
      %p146 = scmp.ne.s32.totalorder %s131, %s145
      %p147 = scmp.eq.s32.totalorder %s32, 0
      %p148 = por %p146, %p147
      %s150 = sadd.s32 %s149, 1
      %p153 = scmp.eq.s32.totalorder %s26, 1
      %p154 = scmp.ne.s32.totalorder %s149, %s151
      %p155 = scmp.eq.s32.totalorder %s26, 0
      %p156 = por %p154, %p155
      %p157 = scmp.ne.s32.totalorder %s149, %s151
      %p158 = scmp.eq.s32.totalorder %s31, 1
      %p159 = por %p157, %p158
      %p160 = scmp.ne.s32.totalorder %s151, %s152
      %p161 = scmp.eq.s32.totalorder %s31, 0
      %p162 = por %p160, %p161
      %p163 = scmp.ne.s32.totalorder %s151, %s152
      %p164 = scmp.eq.s32.totalorder %s32, 1
      %p165 = por %p163, %p164
      %p167 = scmp.ne.s32.totalorder %s152, %s166
      %p168 = scmp.eq.s32.totalorder %s32, 0
      %p169 = por %p167, %p168
      %s171 = sadd.s32 %s170, 1
      %p174 = scmp.eq.s32.totalorder %s26, 1
      %p175 = scmp.ne.s32.totalorder %s170, %s172
      %p176 = scmp.eq.s32.totalorder %s26, 0
      %p177 = por %p175, %p176
      %p178 = scmp.ne.s32.totalorder %s170, %s172
      %p179 = scmp.eq.s32.totalorder %s31, 1
      %p180 = por %p178, %p179
      %p181 = scmp.ne.s32.totalorder %s172, %s173
      %p182 = scmp.eq.s32.totalorder %s31, 0
      %p183 = por %p181, %p182
      %p184 = scmp.ne.s32.totalorder %s172, %s173
      %p185 = scmp.eq.s32.totalorder %s32, 1
      %p186 = por %p184, %p185
      %p188 = scmp.ne.s32.totalorder %s173, %s187
      %p189 = scmp.eq.s32.totalorder %s32, 0
      %p190 = por %p188, %p189
      %s192 = sadd.s32 %s191, 1
      %p195 = scmp.eq.s32.totalorder %s26, 1
      %p196 = scmp.ne.s32.totalorder %s191, %s193
      %p197 = scmp.eq.s32.totalorder %s26, 0
      %p198 = por %p196, %p197
      %p199 = scmp.ne.s32.totalorder %s191, %s193
      %p200 = scmp.eq.s32.totalorder %s31, 1
      %p201 = por %p199, %p200
      %p202 = scmp.ne.s32.totalorder %s193, %s194
      %p203 = scmp.eq.s32.totalorder %s31, 0
      %p204 = por %p202, %p203
      %p205 = scmp.ne.s32.totalorder %s193, %s194
      %p206 = scmp.eq.s32.totalorder %s32, 1
      %p207 = por %p205, %p206
      %p209 = scmp.ne.s32.totalorder %s194, %s208
      %p210 = scmp.eq.s32.totalorder %s32, 0
      %p211 = por %p209, %p210
      %s213 = sadd.s32 %s212, 1
      %p216 = scmp.eq.s32.totalorder %s26, 1
      %p217 = scmp.ne.s32.totalorder %s212, %s214
      %p218 = scmp.eq.s32.totalorder %s26, 0
      %p219 = por %p217, %p218
      %p220 = scmp.ne.s32.totalorder %s212, %s214
      %p221 = scmp.eq.s32.totalorder %s31, 1
      %p222 = por %p220, %p221
      %p223 = scmp.ne.s32.totalorder %s214, %s215
      %p224 = scmp.eq.s32.totalorder %s31, 0
      %p225 = por %p223, %p224
      %p226 = scmp.ne.s32.totalorder %s214, %s215
      %p227 = scmp.eq.s32.totalorder %s32, 1
      %p228 = por %p226, %p227
      %p230 = scmp.ne.s32.totalorder %s215, %s229
      %p231 = scmp.eq.s32.totalorder %s32, 0
      %p232 = por %p230, %p231
      %s234 = sadd.s32 %s233, 1
      %p237 = scmp.eq.s32.totalorder %s26, 1
      %p238 = scmp.ne.s32.totalorder %s233, %s235
      %p239 = scmp.eq.s32.totalorder %s26, 0
      %p240 = por %p238, %p239
      %p241 = scmp.ne.s32.totalorder %s233, %s235
      %p242 = scmp.eq.s32.totalorder %s31, 1
      %p243 = por %p241, %p242
      %p244 = scmp.ne.s32.totalorder %s235, %s236
      %p245 = scmp.eq.s32.totalorder %s31, 0
      %p246 = por %p244, %p245
      %p247 = scmp.ne.s32.totalorder %s235, %s236
      %p248 = scmp.eq.s32.totalorder %s32, 1
      %p249 = por %p247, %p248
      %p251 = scmp.ne.s32.totalorder %s236, %s250
      %p252 = scmp.eq.s32.totalorder %s32, 0
      %p253 = por %p251, %p252
      %s254 = ssub.s32 %s26, %s33
      %p255 = scmp.eq.s32.totalorder %s254, 0
      %s257 = sadd.s32 %s256, 1
      %s258 = scalar_select %p255, %s256, %s257
      %p261 = pneg %p255
      %p262 = scmp.eq.s32.totalorder %s26, 1
      %p263 = por %p261, %p262
      %p264 = scmp.ne.s32.totalorder %s256, %s259
      %p265 = scmp.eq.s32.totalorder %s26, 0
      %p266 = por %p264, %p265
      %p267 = scmp.ne.s32.totalorder %s256, %s259
      %p268 = scmp.eq.s32.totalorder %s31, 1
      %p269 = por %p267, %p268
      %p270 = scmp.ne.s32.totalorder %s259, %s260
      %p271 = scmp.eq.s32.totalorder %s31, 0
      %p272 = por %p270, %p271
      %p273 = scmp.ne.s32.totalorder %s259, %s260
      %p274 = scmp.eq.s32.totalorder %s32, 1
      %p275 = por %p273, %p274
      %p277 = scmp.ne.s32.totalorder %s260, %s276
      %p278 = scmp.eq.s32.totalorder %s32, 0
      %p279 = por %p277, %p278
      %p280 = scmp.le.s32.totalorder 1, %s26
      %p281 = scmp.lt.s32.totalorder %s26, 3
      %p282 = pnand %p280, %p281
      %p283 = pneg %p282
      // Predicated region
      $region9: #{tpu_custom_call.1} parent=5 // pred_check
        _
      $region10: #{tpu_custom_call.1} parent=5 // pred_check_branch
        %285 = sbr.rel (%p282) target = $region12
      $region11: #{tpu_custom_call.1} parent=5 // pred_region
        %s286 = ssub.s32 %s26, 1
        // Predicated region
        $region13: #{tpu_custom_call.1} parent=11 // pred_check
          %p287 = pneg %p99
        $region14: #{tpu_custom_call.1} parent=11 // pred_check_branch
          %289 = sbr.rel (%p287) target = $region16
        $region15: #{tpu_custom_call.1} parent=11 // pred_region
          %s291 = ssub.s32 256, 256
          %292 = vsyncadd [#allocation6], %s291
          %s293 = sshll.u32 [#allocation7], 4
          %s294 = int_to_ptr.vmem [resolvable:$true] %s293
          %299 = dma.hbm_to_vmem [thread:$0]  %s2, 256, %s294, [#allocation6], 128, 128, 8
        $region16: #{tpu_custom_call.1} parent=11 // pred_fallthru
          _
        // Predicated region
        $region17: #{tpu_custom_call.1} parent=11 // pred_check
          %p300 = pneg %p120
        $region18: #{tpu_custom_call.1} parent=11 // pred_check_branch
          %302 = sbr.rel (%p300) target = $region20
        $region19: #{tpu_custom_call.1} parent=11 // pred_region
          _
        $region20: #{tpu_custom_call.1} parent=11 // pred_fallthru
          _
        // Predicated region
        $region21: #{tpu_custom_call.1} parent=11 // pred_check
          %p303 = pneg %p141
        $region22: #{tpu_custom_call.1} parent=11 // pred_check_branch
          %305 = sbr.rel (%p303) target = $region24
        $region23: #{tpu_custom_call.1} parent=11 // pred_region
          %s307 = ssub.s32 2048, 2048
          %308 = vsyncadd [#allocation9], %s307
          %s309 = sshll.u32 [#allocation8], 4
          %s310 = int_to_ptr.vmem [resolvable:$true] %s309
          %315 = dma.hbm_to_vmem [thread:$0]  %s4, 2048, %s310, [#allocation9], 128, 128, 8
        $region24: #{tpu_custom_call.1} parent=11 // pred_fallthru
          _
        // Predicated region
        $region25: #{tpu_custom_call.1} parent=11 // pred_check
          %p316 = pneg %p162
        $region26: #{tpu_custom_call.1} parent=11 // pred_check_branch
          %318 = sbr.rel (%p316) target = $region28
        $region27: #{tpu_custom_call.1} parent=11 // pred_region
          _
        $region28: #{tpu_custom_call.1} parent=11 // pred_fallthru
          _
        // Predicated region
        $region29: #{tpu_custom_call.1} parent=11 // pred_check
          %p319 = pneg %p183
        $region30: #{tpu_custom_call.1} parent=11 // pred_check_branch
          %321 = sbr.rel (%p319) target = $region32
        $region31: #{tpu_custom_call.1} parent=11 // pred_region
          _
        $region32: #{tpu_custom_call.1} parent=11 // pred_fallthru
          _
        // Predicated region
        $region33: #{tpu_custom_call.1} parent=11 // pred_check
          %p322 = pneg %p204
        $region34: #{tpu_custom_call.1} parent=11 // pred_check_branch
          %324 = sbr.rel (%p322) target = $region36
        $region35: #{tpu_custom_call.1} parent=11 // pred_region
          _
        $region36: #{tpu_custom_call.1} parent=11 // pred_fallthru
          _
        // Predicated region
        $region37: #{tpu_custom_call.1} parent=11 // pred_check
          %p325 = pneg %p225
        $region38: #{tpu_custom_call.1} parent=11 // pred_check_branch
          %327 = sbr.rel (%p325) target = $region40
        $region39: #{tpu_custom_call.1} parent=11 // pred_region
          %s329 = ssub.s32 2048, 2048
          %330 = vsyncadd [#allocation9], %s329
          %s331 = sshll.u32 [#allocation10], 4
          %s332 = int_to_ptr.vmem [resolvable:$true] %s331
          %337 = dma.hbm_to_vmem [thread:$0]  %s8, 2048, %s332, [#allocation9], 128, 128, 8
        $region40: #{tpu_custom_call.1} parent=11 // pred_fallthru
          _
        // Predicated region
        $region41: #{tpu_custom_call.1} parent=11 // pred_check
          %p338 = pneg %p246
        $region42: #{tpu_custom_call.1} parent=11 // pred_check_branch
          %340 = sbr.rel (%p338) target = $region44
        $region43: #{tpu_custom_call.1} parent=11 // pred_region
          _
        $region44: #{tpu_custom_call.1} parent=11 // pred_fallthru
          _
      $region12: #{tpu_custom_call.1} parent=5 // pred_fallthru
        _
      %p341 = scmp.lt.s32.totalorder %s26, 2
      // Predicated region
      $region45: #{tpu_custom_call.1} parent=5 // pred_check
        %p342 = pneg %p341
      $region46: #{tpu_custom_call.1} parent=5 // pred_check_branch
        %344 = sbr.rel (%p342) target = $region48
      $region47: #{tpu_custom_call.1} parent=5 // pred_region
        // Predicated region
        $region49: #{tpu_custom_call.1} parent=47 // pred_check
          %p345 = pneg %p46
        $region50: #{tpu_custom_call.1} parent=47 // pred_check_branch
          %347 = sbr.rel (%p345) target = $region52
        $region51: #{tpu_custom_call.1} parent=47 // pred_region
          %s348 = sand.u32 %s36, 1
          %s349 = scalar_lea.sflag [#allocation3], %s348
          %s350 = sand.u32 %s36, 1
          %s351 = smul.addr %s350, 8
          %s352 = scalar_lea.vmem [#allocation2], %s351
          %s354 = ssub.s32 128, 128
          %355 = vsyncadd %s349, %s354
          %s356 = smul.addr %s26, 128
          %s357 = scalar_lea.hbm %s0, %s356
          %s359 = sshll.u32 %s352, 4
          %s360 = int_to_ptr.vmem [resolvable:$true] %s359
          %362 = dma.hbm_to_vmem [thread:$0]  %s357, 128, %s360, %s349
        $region52: #{tpu_custom_call.1} parent=47 // pred_fallthru
          _
        // Predicated region
        $region53: #{tpu_custom_call.1} parent=47 // pred_check
          %p363 = pneg %p72
        $region54: #{tpu_custom_call.1} parent=47 // pred_check_branch
          %365 = sbr.rel (%p363) target = $region56
        $region55: #{tpu_custom_call.1} parent=47 // pred_region
          %s366 = sand.u32 %s26, 1
          %s367 = scalar_lea.sflag [#allocation6], %s366
          %s368 = sand.u32 %s62, 1
          %s369 = smul.addr %s368, 8
          %s370 = scalar_lea.vmem [#allocation5], %s369
          %s372 = ssub.s32 128, 128
          %373 = vsyncadd %s367, %s372
          %s374 = smul.addr %s26, 128
          %s375 = scalar_lea.hbm %s1, %s374
          %s377 = sshll.u32 %s370, 4
          %s378 = int_to_ptr.vmem [resolvable:$true] %s377
          %380 = dma.hbm_to_vmem [thread:$0]  %s375, 128, %s378, %s367
        $region56: #{tpu_custom_call.1} parent=47 // pred_fallthru
          _
      $region48: #{tpu_custom_call.1} parent=5 // pred_fallthru
        _
      %p381 = scmp.le.s32.totalorder 1, %s26
      %p382 = scmp.lt.s32.totalorder %s26, 3
      %p383 = pnand %p381, %p382
      %p384 = pneg %p383
      // Predicated region
      $region57: #{tpu_custom_call.1} parent=5 // pred_check
        _
      $region58: #{tpu_custom_call.1} parent=5 // pred_check_branch
        %386 = sbr.rel (%p383) target = $region60
      $region59: #{tpu_custom_call.1} parent=5 // pred_region
        %s387 = ssub.s32 %s26, 1
        %s388 = sand.u32 %s39, 1
        %s389 = scalar_lea.sflag [#allocation3], %s388
        %s390 = sand.u32 %s39, 1
        %s391 = smul.addr %s390, 8
        %s392 = scalar_lea.vmem [#allocation2], %s391
        // Predicated region
        $region61: #{tpu_custom_call.1} parent=59 // pred_check
          %p393 = pneg %p52
        $region62: #{tpu_custom_call.1} parent=59 // pred_check_branch
          %395 = sbr.rel (%p393) target = $region64
        $region63: #{tpu_custom_call.1} parent=59 // pred_region
          %396 = dma.done %s389, 128
        $region64: #{tpu_custom_call.1} parent=59 // pred_fallthru
          _
        %s397 = sand.u32 %s31, 1
        %s398 = scalar_lea.sflag [#allocation6], %s397
        %s399 = sand.u32 %s65, 1
        %s400 = smul.addr %s399, 8
        %s401 = scalar_lea.vmem [#allocation5], %s400
        // Predicated region
        $region65: #{tpu_custom_call.1} parent=59 // pred_check
          %p402 = pneg %p78
        $region66: #{tpu_custom_call.1} parent=59 // pred_check_branch
          %404 = sbr.rel (%p402) target = $region68
        $region67: #{tpu_custom_call.1} parent=59 // pred_region
          %405 = dma.done %s398, 128
        $region68: #{tpu_custom_call.1} parent=59 // pred_fallthru
          _
        // Predicated region
        $region69: #{tpu_custom_call.1} parent=59 // pred_check
          %p406 = pneg %p99
        $region70: #{tpu_custom_call.1} parent=59 // pred_check_branch
          %408 = sbr.rel (%p406) target = $region72
        $region71: #{tpu_custom_call.1} parent=59 // pred_region
          %409 = dma.done [#allocation6], 256
        $region72: #{tpu_custom_call.1} parent=59 // pred_fallthru
          _
        // Predicated region
        $region73: #{tpu_custom_call.1} parent=59 // pred_check
          %p410 = pneg %p141
        $region74: #{tpu_custom_call.1} parent=59 // pred_check_branch
          %412 = sbr.rel (%p410) target = $region76
        $region75: #{tpu_custom_call.1} parent=59 // pred_region
          %413 = dma.done [#allocation9], 2048
        $region76: #{tpu_custom_call.1} parent=59 // pred_fallthru
          _
        // Predicated region
        $region77: #{tpu_custom_call.1} parent=59 // pred_check
          %p414 = pneg %p225
        $region78: #{tpu_custom_call.1} parent=59 // pred_check_branch
          %416 = sbr.rel (%p414) target = $region80
        $region79: #{tpu_custom_call.1} parent=59 // pred_region
          %417 = dma.done [#allocation9], 2048
        $region80: #{tpu_custom_call.1} parent=59 // pred_fallthru
          _
        %s418 = sand.u32 %s39, 1
        %s419 = scalar_lea.sflag [#allocation3], %s418
        %s420 = sand.u32 %s39, 1
        %s421 = smul.addr %s420, 8
        %s422 = scalar_lea.vmem [#allocation2], %s421
        %p423 = pneg %p52
        %p424 = pneg %p49
        %s425 = sand.u32 %s31, 1
        %s426 = scalar_lea.sflag [#allocation6], %s425
        %s427 = sand.u32 %s65, 1
        %s428 = smul.addr %s427, 8
        %s429 = scalar_lea.vmem [#allocation5], %s428
        %p430 = pneg %p78
        %p431 = pneg %p75
        %p432 = pneg %p99
        %p433 = pneg %p96
        %p434 = pneg %p120
        %p435 = pneg %p117
        %p436 = pneg %p141
        %p437 = pneg %p138
        %p438 = pneg %p162
        %p439 = pneg %p159
        %p440 = pneg %p183
        %p441 = pneg %p180
        %p442 = pneg %p204
        %p443 = pneg %p201
        %p444 = pneg %p225
        %p445 = pneg %p222
        %p446 = pneg %p246
        %p447 = pneg %p243
        %p448 = pneg %p272
        %p449 = pneg %p269
        %s450 = sand.u32 %s259, 1
        %s451 = scalar_lea.sflag [#allocation4], %s450
        %s452 = sand.u32 %s259, 1
        %s453 = smul.addr %s452, 8
        %s454 = scalar_lea.vmem [#allocation11], %s453
        %v455 = vld [vmem:[%s392] sm:$0xff]
        %v456 = vld [vmem:[%s401] sm:$0xff]
        %v457 = vld [vmem:[#allocation7] sm:$0xff]
        %v458 = vld [vmem:[#allocation7 + $0x8] sm:$0xff]
        %v459 = vld [vmem:[%s3] sm:$0x1]
        %v461 = vlaneseq
        %v462 = vshrl.u32 %v461, 7
        %v463 = vsub.s32 0, %v462
        %v464 = vrot.slane %v459, %v463
        %vm466 = vcmask 130048
        %v468 = vsel %vm466, %v455, 0
        %470 = vmatprep.subr.mxu0 0.0
        %471 = vmatpush1.msra.mxu0 %v457
        %472 = vmatprep.subr.mxu0 0.0
        %473 = vmatpush1.msra.mxu0 %v458
        %474 = vmatprep.subr.mxu0 0.0
        %475 = vmatpush1.msra.mxu0 0.0
        %476 = vmatprep.subr.mxu0 0.0
        %477 = vmatpush1.msra.mxu0 0.0
        %478 = vmatprep.subr.mxu0 0.0
        %479 = vmatpush1.msra.mxu0 0.0
        %480 = vmatprep.subr.mxu0 0.0
        %481 = vmatpush1.msra.mxu0 0.0
        %482 = vmatprep.subr.mxu0 0.0
        %483 = vmatpush1.msra.mxu0 0.0
        %484 = vmatprep.subr.mxu0 0.0
        %485 = vmatpush1.msra.mxu0 0.0
        %486 = vmatprep.subr.mxu0 0.0
        %487 = vmatpush1.msra.mxu0 0.0
        %488 = vmatprep.subr.mxu0 0.0
        %489 = vmatpush1.msra.mxu0 0.0
        %490 = vmatprep.subr.mxu0 0.0
        %491 = vmatpush1.msra.mxu0 0.0
        %492 = vmatprep.subr.mxu0 0.0
        %493 = vmatpush1.msra.mxu0 0.0
        %494 = vmatprep.subr.mxu0 0.0
        %495 = vmatpush1.msra.mxu0 0.0
        %496 = vmatprep.subr.mxu0 0.0
        %497 = vmatpush1.msra.mxu0 0.0
        %498 = vmatprep.subr.mxu0 0.0
        %499 = vmatpush1.msra.mxu0 0.0
        %500 = vmatprep.subr.mxu0 0.0
        %501 = vmatpush1.msra.mxu0 0.0
        %502 = vmatprep.subr.mxu0 0.0
        %503 = vmatpush1.msra.mxu0 0.0
        %504 = vmatprep.subr.mxu0 0.0
        %505 = vmatpush1.msra.mxu0 0.0
        %506 = vmatprep.subr.mxu0 0.0
        %507 = vmatpush1.msra.mxu0 0.0
        %508 = vmatprep.subr.mxu0 0.0
        %509 = vmatpush1.msra.mxu0 0.0
        %510 = vmatprep.subr.mxu0 0.0
        %511 = vmatpush1.msra.mxu0 0.0
        %512 = vmatprep.subr.mxu0 0.0
        %513 = vmatpush1.msra.mxu0 0.0
        %514 = vmatprep.subr.mxu0 0.0
        %515 = vmatpush1.msra.mxu0 0.0
        %516 = vmatprep.subr.mxu0 0.0
        %517 = vmatpush1.msra.mxu0 0.0
        %518 = vmatprep.subr.mxu0 0.0
        %519 = vmatpush1.msra.mxu0 0.0
        %520 = vmatprep.subr.mxu0 0.0
        %521 = vmatpush1.msra.mxu0 0.0
        %522 = vmatprep.subr.mxu0 0.0
        %523 = vmatpush1.msra.mxu0 0.0
        %524 = vmatprep.subr.mxu0 0.0
        %525 = vmatpush1.msra.mxu0 0.0
        %526 = vmatprep.subr.mxu0 0.0
        %527 = vmatpush1.msra.mxu0 0.0
        %528 = vmatprep.subr.mxu0 0.0
        %529 = vmatpush1.msra.mxu0 0.0
        %530 = vmatprep.subr.mxu0 0.0
        %531 = vmatpush1.msra.mxu0 0.0
        %532 = vmatprep.subr.mxu0 0.0
        %533 = vmatpush1.msra.mxu0 0.0
        %534 = vmatprep.mubr.f32.mxu0 0.0
        %535 = vmatmul.mubr.f32.gmra.mrb[0].mxu0 %v468
        %v536 = vpop.f32.mrb[0].mxu0
        %v537 = vadd.f32 %v464, %v536
        %v538 = vpop.f32.mrb[0].mxu0
        %539 = vdwg.mxu0
        %v540 = vld [vmem:[#allocation8] sm:$0xff]
        %v541 = vld [vmem:[#allocation8 + $0x8] sm:$0xff]
        %v542 = vld [vmem:[#allocation8 + $0x10] sm:$0xff]
        %v543 = vld [vmem:[#allocation8 + $0x18] sm:$0xff]
        %v544 = vld [vmem:[#allocation8 + $0x20] sm:$0xff]
        %v545 = vld [vmem:[#allocation8 + $0x28] sm:$0xff]
        %v546 = vld [vmem:[#allocation8 + $0x30] sm:$0xff]
        %v547 = vld [vmem:[#allocation8 + $0x38] sm:$0xff]
        %v548 = vld [vmem:[#allocation8 + $0x40] sm:$0xff]
        %v549 = vld [vmem:[#allocation8 + $0x48] sm:$0xff]
        %v550 = vld [vmem:[#allocation8 + $0x50] sm:$0xff]
        %v551 = vld [vmem:[#allocation8 + $0x58] sm:$0xff]
        %v552 = vld [vmem:[#allocation8 + $0x60] sm:$0xff]
        %v553 = vld [vmem:[#allocation8 + $0x68] sm:$0xff]
        %v554 = vld [vmem:[#allocation8 + $0x70] sm:$0xff]
        %v555 = vld [vmem:[#allocation8 + $0x78] sm:$0xff]
        %v556 = vld [vmem:[%s5] sm:$0x1]
        %v557 = vld [vmem:[%s6] sm:$0x1]
        %v558 = vld [vmem:[%s7] sm:$0x1]
        %v560 = vlaneseq
        %v561 = vshrl.u32 %v560, 7
        %v562 = vsub.s32 0, %v561
        %v563 = vrot.slane %v556, %v562
        %565 = vmatprep.subr.mxu0 0.0
        %566 = vmatpush1.msra.mxu0 %v540
        %567 = vmatprep.subr.mxu0 0.0
        %568 = vmatpush1.msra.mxu0 %v541
        %569 = vmatprep.subr.mxu0 0.0
        %570 = vmatpush1.msra.mxu0 %v542
        %571 = vmatprep.subr.mxu0 0.0
        %572 = vmatpush1.msra.mxu0 %v543
        %573 = vmatprep.subr.mxu0 0.0
        %574 = vmatpush1.msra.mxu0 %v544
        %575 = vmatprep.subr.mxu0 0.0
        %576 = vmatpush1.msra.mxu0 %v545
        %577 = vmatprep.subr.mxu0 0.0
        %578 = vmatpush1.msra.mxu0 %v546
        %579 = vmatprep.subr.mxu0 0.0
        %580 = vmatpush1.msra.mxu0 %v547
        %581 = vmatprep.subr.mxu0 0.0
        %582 = vmatpush1.msra.mxu0 %v548
        %583 = vmatprep.subr.mxu0 0.0
        %584 = vmatpush1.msra.mxu0 %v549
        %585 = vmatprep.subr.mxu0 0.0
        %586 = vmatpush1.msra.mxu0 %v550
        %587 = vmatprep.subr.mxu0 0.0
        %588 = vmatpush1.msra.mxu0 %v551
        %589 = vmatprep.subr.mxu0 0.0
        %590 = vmatpush1.msra.mxu0 %v552
        %591 = vmatprep.subr.mxu0 0.0
        %592 = vmatpush1.msra.mxu0 %v553
        %593 = vmatprep.subr.mxu0 0.0
        %594 = vmatpush1.msra.mxu0 %v554
        %595 = vmatprep.subr.mxu0 0.0
        %596 = vmatpush1.msra.mxu0 %v555
        %597 = vmatprep.subr.mxu0 0.0
        %598 = vmatpush1.msra.mxu0 0.0
        %599 = vmatprep.subr.mxu0 0.0
        %600 = vmatpush1.msra.mxu0 0.0
        %601 = vmatprep.subr.mxu0 0.0
        %602 = vmatpush1.msra.mxu0 0.0
        %603 = vmatprep.subr.mxu0 0.0
        %604 = vmatpush1.msra.mxu0 0.0
        %605 = vmatprep.subr.mxu0 0.0
        %606 = vmatpush1.msra.mxu0 0.0
        %607 = vmatprep.subr.mxu0 0.0
        %608 = vmatpush1.msra.mxu0 0.0
        %609 = vmatprep.subr.mxu0 0.0
        %610 = vmatpush1.msra.mxu0 0.0
        %611 = vmatprep.subr.mxu0 0.0
        %612 = vmatpush1.msra.mxu0 0.0
        %613 = vmatprep.subr.mxu0 0.0
        %614 = vmatpush1.msra.mxu0 0.0
        %615 = vmatprep.subr.mxu0 0.0
        %616 = vmatpush1.msra.mxu0 0.0
        %617 = vmatprep.subr.mxu0 0.0
        %618 = vmatpush1.msra.mxu0 0.0
        %619 = vmatprep.subr.mxu0 0.0
        %620 = vmatpush1.msra.mxu0 0.0
        %621 = vmatprep.subr.mxu0 0.0
        %622 = vmatpush1.msra.mxu0 0.0
        %623 = vmatprep.subr.mxu0 0.0
        %624 = vmatpush1.msra.mxu0 0.0
        %625 = vmatprep.subr.mxu0 0.0
        %626 = vmatpush1.msra.mxu0 0.0
        %627 = vmatprep.subr.mxu0 0.0
        %628 = vmatpush1.msra.mxu0 0.0
        %629 = vmatprep.mubr.f32.mxu0 0.0
        %630 = vmatmul.mubr.f32.gmra.mrb[0].mxu0 %v537
        %v631 = vpop.f32.mrb[0].mxu0
        %v632 = vadd.f32 %v563, %v631
        %v633 = vpop.f32.mrb[0].mxu0
        %634 = vdwg.mxu0
        %635 = vadd.xlane.f32.xlu0 %v632
        %v636 = vpop.xlane.xlu0 %635
        %v637 = vmul.f32 %v632, %v632
        %638 = vadd.xlane.f32.xlu0 %v637
        %v639 = vpop.xlane.xlu0 %638
        %v640 = vmul.f32 %v636, 0.03125
        %v641 = vmul.f32 %v639, 0.03125
        %v642 = vmul.f32 %v640, %v640
        %v643 = vsub.f32 %v641, %v642
        %v644 = vmax.f32 %v643, 0.0
        %v645 = vsub.f32 %v632, %v640
        %v646 = vadd.f32 %v644, 1e-05
        %v647 = vrsqrt.pop %v646
        %v648 = vmul.f32 %v645, %v647
        %v650 = vlaneseq
        %v651 = vshrl.u32 %v650, 7
        %v652 = vsub.s32 0, %v651
        %v653 = vrot.slane %v557, %v652
        %v655 = vmul.f32 %v648, %v653
        %v657 = vlaneseq
        %v658 = vshrl.u32 %v657, 7
        %v659 = vsub.s32 0, %v658
        %v660 = vrot.slane %v558, %v659
        %v662 = vadd.f32 %v655, %v660
        %v663 = vmax.f32 %v662, 0.0
        %v664 = vadd.f32 %v537, %v663
        %v665 = vmul.f32 %v664, %v456
        %666 = vmatprep.subr.mxu0 0.0
        %667 = vmatpush1.msra.mxu0 %v540
        %668 = vmatprep.subr.mxu0 0.0
        %669 = vmatpush1.msra.mxu0 %v541
        %670 = vmatprep.subr.mxu0 0.0
        %671 = vmatpush1.msra.mxu0 %v542
        %672 = vmatprep.subr.mxu0 0.0
        %673 = vmatpush1.msra.mxu0 %v543
        %674 = vmatprep.subr.mxu0 0.0
        %675 = vmatpush1.msra.mxu0 %v544
        %676 = vmatprep.subr.mxu0 0.0
        %677 = vmatpush1.msra.mxu0 %v545
        %678 = vmatprep.subr.mxu0 0.0
        %679 = vmatpush1.msra.mxu0 %v546
        %680 = vmatprep.subr.mxu0 0.0
        %681 = vmatpush1.msra.mxu0 %v547
        %682 = vmatprep.subr.mxu0 0.0
        %683 = vmatpush1.msra.mxu0 %v548
        %684 = vmatprep.subr.mxu0 0.0
        %685 = vmatpush1.msra.mxu0 %v549
        %686 = vmatprep.subr.mxu0 0.0
        %687 = vmatpush1.msra.mxu0 %v550
        %688 = vmatprep.subr.mxu0 0.0
        %689 = vmatpush1.msra.mxu0 %v551
        %690 = vmatprep.subr.mxu0 0.0
        %691 = vmatpush1.msra.mxu0 %v552
        %692 = vmatprep.subr.mxu0 0.0
        %693 = vmatpush1.msra.mxu0 %v553
        %694 = vmatprep.subr.mxu0 0.0
        %695 = vmatpush1.msra.mxu0 %v554
        %696 = vmatprep.subr.mxu0 0.0
        %697 = vmatpush1.msra.mxu0 %v555
        %698 = vmatprep.subr.mxu0 0.0
        %699 = vmatpush1.msra.mxu0 0.0
        %700 = vmatprep.subr.mxu0 0.0
        %701 = vmatpush1.msra.mxu0 0.0
        %702 = vmatprep.subr.mxu0 0.0
        %703 = vmatpush1.msra.mxu0 0.0
        %704 = vmatprep.subr.mxu0 0.0
        %705 = vmatpush1.msra.mxu0 0.0
        %706 = vmatprep.subr.mxu0 0.0
        %707 = vmatpush1.msra.mxu0 0.0
        %708 = vmatprep.subr.mxu0 0.0
        %709 = vmatpush1.msra.mxu0 0.0
        %710 = vmatprep.subr.mxu0 0.0
        %711 = vmatpush1.msra.mxu0 0.0
        %712 = vmatprep.subr.mxu0 0.0
        %713 = vmatpush1.msra.mxu0 0.0
        %714 = vmatprep.subr.mxu0 0.0
        %715 = vmatpush1.msra.mxu0 0.0
        %716 = vmatprep.subr.mxu0 0.0
        %717 = vmatpush1.msra.mxu0 0.0
        %718 = vmatprep.subr.mxu0 0.0
        %719 = vmatpush1.msra.mxu0 0.0
        %720 = vmatprep.subr.mxu0 0.0
        %721 = vmatpush1.msra.mxu0 0.0
        %722 = vmatprep.subr.mxu0 0.0
        %723 = vmatpush1.msra.mxu0 0.0
        %724 = vmatprep.subr.mxu0 0.0
        %725 = vmatpush1.msra.mxu0 0.0
        %726 = vmatprep.subr.mxu0 0.0
        %727 = vmatpush1.msra.mxu0 0.0
        %728 = vmatprep.subr.mxu0 0.0
        %729 = vmatpush1.msra.mxu0 0.0
        %730 = vmatprep.mubr.f32.mxu0 0.0
        %731 = vmatmul.mubr.f32.gmra.mrb[0].mxu0 %v665
        %v732 = vpop.f32.mrb[0].mxu0
        %v733 = vadd.f32 %v563, %v732
        %v734 = vpop.f32.mrb[0].mxu0
        %735 = vdwg.mxu0
        %736 = vadd.xlane.f32.xlu0 %v733
        %v737 = vpop.xlane.xlu0 %736
        %v738 = vmul.f32 %v733, %v733
        %739 = vadd.xlane.f32.xlu0 %v738
        %v740 = vpop.xlane.xlu0 %739
        %v741 = vmul.f32 %v737, 0.03125
        %v742 = vmul.f32 %v740, 0.03125
        %v743 = vmul.f32 %v741, %v741
        %v744 = vsub.f32 %v742, %v743
        %v745 = vmax.f32 %v744, 0.0
        %v746 = vsub.f32 %v733, %v741
        %v747 = vadd.f32 %v745, 1e-05
        %v748 = vrsqrt.pop %v747
        %v749 = vmul.f32 %v746, %v748
        %v750 = vmul.f32 %v749, %v653
        %v751 = vadd.f32 %v750, %v660
        %v752 = vmax.f32 %v751, 0.0
        %v753 = vadd.f32 %v665, %v752
        %v754 = vmul.f32 %v753, %v456
        %v755 = vld [vmem:[#allocation10] sm:$0xff]
        %v756 = vld [vmem:[#allocation10 + $0x8] sm:$0xff]
        %v757 = vld [vmem:[#allocation10 + $0x10] sm:$0xff]
        %v758 = vld [vmem:[#allocation10 + $0x18] sm:$0xff]
        %v759 = vld [vmem:[#allocation10 + $0x20] sm:$0xff]
        %v760 = vld [vmem:[#allocation10 + $0x28] sm:$0xff]
        %v761 = vld [vmem:[#allocation10 + $0x30] sm:$0xff]
        %v762 = vld [vmem:[#allocation10 + $0x38] sm:$0xff]
        %v763 = vld [vmem:[#allocation10 + $0x40] sm:$0xff]
        %v764 = vld [vmem:[#allocation10 + $0x48] sm:$0xff]
        %v765 = vld [vmem:[#allocation10 + $0x50] sm:$0xff]
        %v766 = vld [vmem:[#allocation10 + $0x58] sm:$0xff]
        %v767 = vld [vmem:[#allocation10 + $0x60] sm:$0xff]
        %v768 = vld [vmem:[#allocation10 + $0x68] sm:$0xff]
        %v769 = vld [vmem:[#allocation10 + $0x70] sm:$0xff]
        %v770 = vld [vmem:[#allocation10 + $0x78] sm:$0xff]
        %v771 = vld [vmem:[%s9] sm:$0x1]
        %v773 = vlaneseq
        %v774 = vshrl.u32 %v773, 7
        %v775 = vsub.s32 0, %v774
        %v776 = vrot.slane %v771, %v775
        %778 = vmatprep.subr.mxu0 0.0
        %779 = vmatpush1.msra.mxu0 %v755
        %780 = vmatprep.subr.mxu0 0.0
        %781 = vmatpush1.msra.mxu0 %v756
        %782 = vmatprep.subr.mxu0 0.0
        %783 = vmatpush1.msra.mxu0 %v757
        %784 = vmatprep.subr.mxu0 0.0
        %785 = vmatpush1.msra.mxu0 %v758
        %786 = vmatprep.subr.mxu0 0.0
        %787 = vmatpush1.msra.mxu0 %v759
        %788 = vmatprep.subr.mxu0 0.0
        %789 = vmatpush1.msra.mxu0 %v760
        %790 = vmatprep.subr.mxu0 0.0
        %791 = vmatpush1.msra.mxu0 %v761
        %792 = vmatprep.subr.mxu0 0.0
        %793 = vmatpush1.msra.mxu0 %v762
        %794 = vmatprep.subr.mxu0 0.0
        %795 = vmatpush1.msra.mxu0 %v763
        %796 = vmatprep.subr.mxu0 0.0
        %797 = vmatpush1.msra.mxu0 %v764
        %798 = vmatprep.subr.mxu0 0.0
        %799 = vmatpush1.msra.mxu0 %v765
        %800 = vmatprep.subr.mxu0 0.0
        %801 = vmatpush1.msra.mxu0 %v766
        %802 = vmatprep.subr.mxu0 0.0
        %803 = vmatpush1.msra.mxu0 %v767
        %804 = vmatprep.subr.mxu0 0.0
        %805 = vmatpush1.msra.mxu0 %v768
        %806 = vmatprep.subr.mxu0 0.0
        %807 = vmatpush1.msra.mxu0 %v769
        %808 = vmatprep.subr.mxu0 0.0
        %809 = vmatpush1.msra.mxu0 %v770
        %810 = vmatprep.subr.mxu0 0.0
        %811 = vmatpush1.msra.mxu0 0.0
        %812 = vmatprep.subr.mxu0 0.0
        %813 = vmatpush1.msra.mxu0 0.0
        %814 = vmatprep.subr.mxu0 0.0
        %815 = vmatpush1.msra.mxu0 0.0
        %816 = vmatprep.subr.mxu0 0.0
        %817 = vmatpush1.msra.mxu0 0.0
        %818 = vmatprep.subr.mxu0 0.0
        %819 = vmatpush1.msra.mxu0 0.0
        %820 = vmatprep.subr.mxu0 0.0
        %821 = vmatpush1.msra.mxu0 0.0
        %822 = vmatprep.subr.mxu0 0.0
        %823 = vmatpush1.msra.mxu0 0.0
        %824 = vmatprep.subr.mxu0 0.0
        %825 = vmatpush1.msra.mxu0 0.0
        %826 = vmatprep.subr.mxu0 0.0
        %827 = vmatpush1.msra.mxu0 0.0
        %828 = vmatprep.subr.mxu0 0.0
        %829 = vmatpush1.msra.mxu0 0.0
        %830 = vmatprep.subr.mxu0 0.0
        %831 = vmatpush1.msra.mxu0 0.0
        %832 = vmatprep.subr.mxu0 0.0
        %833 = vmatpush1.msra.mxu0 0.0
        %834 = vmatprep.subr.mxu0 0.0
        %835 = vmatpush1.msra.mxu0 0.0
        %836 = vmatprep.subr.mxu0 0.0
        %837 = vmatpush1.msra.mxu0 0.0
        %838 = vmatprep.subr.mxu0 0.0
        %839 = vmatpush1.msra.mxu0 0.0
        %840 = vmatprep.subr.mxu0 0.0
        %841 = vmatpush1.msra.mxu0 0.0
        %842 = vmatprep.mubr.f32.mxu0 0.0
        %843 = vmatmul.mubr.f32.gmra.mrb[0].mxu0 %v754
        %v844 = vpop.f32.mrb[0].mxu0
        %v845 = vadd.f32 %v776, %v844
        %v846 = vpop.f32.mrb[0].mxu0
        %847 = vdwg.mxu0
        %848 = vst [vmem:[%s454] sm:$0xff] %v845
        %s849 = sand.u32 %s259, 1
        %s850 = scalar_lea.sflag [#allocation4], %s849
        %s851 = sand.u32 %s259, 1
        %s852 = smul.addr %s851, 8
        %s853 = scalar_lea.vmem [#allocation11], %s852
        // Predicated region
        $region81: #{tpu_custom_call.1} parent=59 // pred_check
          %p854 = pneg %p269
        $region82: #{tpu_custom_call.1} parent=59 // pred_check_branch
          %856 = sbr.rel (%p854) target = $region84
        $region83: #{tpu_custom_call.1} parent=59 // pred_region
          %s858 = ssub.s32 128, 128
          %859 = vsyncadd %s850, %s858
          %s860 = smul.addr %s31, 128
          %s861 = scalar_lea.hbm %s10, %s860
          %s863 = sshll.u32 %s853, 4
          %s864 = int_to_ptr.vmem [resolvable:$true] %s863
          %866 = dma.vmem_to_hbm [thread:$0]  %s864, 128, %s861, %s850
        $region84: #{tpu_custom_call.1} parent=59 // pred_fallthru
          _
      $region60: #{tpu_custom_call.1} parent=5 // pred_fallthru
        _
      %p867 = scmp.le.s32.totalorder 2, %s26
      // Predicated region
      $region85: #{tpu_custom_call.1} parent=5 // pred_check
        %p868 = pneg %p867
      $region86: #{tpu_custom_call.1} parent=5 // pred_check_branch
        %870 = sbr.rel (%p868) target = $region88
      $region87: #{tpu_custom_call.1} parent=5 // pred_region
        %s871 = ssub.s32 %s26, 2
        // Predicated region
        $region89: #{tpu_custom_call.1} parent=87 // pred_check
          %p872 = pneg %p275
        $region90: #{tpu_custom_call.1} parent=87 // pred_check_branch
          %874 = sbr.rel (%p872) target = $region92
        $region91: #{tpu_custom_call.1} parent=87 // pred_region
          %s875 = sand.u32 %s260, 1
          %s876 = scalar_lea.sflag [#allocation4], %s875
          %s877 = sand.u32 %s260, 1
          %s878 = smul.addr %s877, 8
          %s879 = scalar_lea.vmem [#allocation11], %s878
          %880 = dma.done %s876, 128
        $region92: #{tpu_custom_call.1} parent=87 // pred_fallthru
          _
      $region88: #{tpu_custom_call.1} parent=5 // pred_fallthru
        _
    $region6: #{tpu_custom_call.1} parent=1 // loop_footer
      %s30 = sadd.s32 1, %s26
    $region7: #{tpu_custom_call.1} parent=1 // loop_footer_branch
      %25 = sbr.rel target = $region3
    $region8: #{tpu_custom_call.1} parent=1 // loop_exit
      _
    %881 = vsyncpa [#allocation3], 1
    %s882 = scalar_lea.sflag [#allocation3], 1
    %883 = vsyncpa %s882, 1
    %884 = vsyncpa [#allocation6], 1
    %s885 = scalar_lea.sflag [#allocation6], 1
    %886 = vsyncpa %s885, 1
    %887 = vsyncpa [#allocation9], 1
    %888 = vsyncpa [#allocation4], 1
    %s889 = scalar_lea.sflag [#allocation4], 1
    %890 = vsyncpa %s889, 1

</llo_original>
